<compile_context>
chip_gen: v6e
topology: v6e:2x2x1
jax: 0.10.0
libtpu: 0.0.40
codegen_flags: <defaults>
</compile_context>

<pallas_src>
import functools

import jax
import jax.numpy as jnp
from jax import lax
from jax.experimental import pallas as pl
from jax.experimental.pallas import tpu as pltpu

EPS = 1e-5
LANE = 128
FUSE_MAX_NODES = 1024            # single fused pallas_call when n_pad <= this
FUSE_MAX_VMEM = 24 << 20         # ... and the fused working set fits this budget


def _round_up(x, m):
    return ((x + m - 1) // m) * m


def _pad2d(a, rows, cols):
    r, c = a.shape
    return jnp.pad(a, ((0, rows - r), (0, cols - c)))


def _maybe_buffered(block_shape, index_map, buffers=None):
    """BlockSpec with optional multi-buffering; silently falls back if unsupported."""
    if buffers is not None and hasattr(pl, "Buffered"):
        try:
            return pl.BlockSpec(block_shape, index_map,
                                pipeline_mode=pl.Buffered(buffers))
        except TypeError:
            pass
    return pl.BlockSpec(block_shape, index_map)


def _layernorm_masked(v, w, b, true_f):
    """LayerNorm over last dim of `v` (f32). Padded lanes (>= true_f) are zero on input
    and stay zero on output (padded affine params are zero)."""
    f_pad = v.shape[-1]
    lane = lax.broadcasted_iota(jnp.int32, (1, f_pad), 1)
    mask = (lane < true_f).astype(jnp.float32)
    mu = jnp.sum(v, axis=-1, keepdims=True) * (1.0 / true_f)
    vc = (v - mu) * mask
    var = jnp.sum(vc * vc, axis=-1, keepdims=True) * (1.0 / true_f)
    return vc * lax.rsqrt(var + EPS) * w + b


# --------------------------------------------------------------------------------------
# Fully fused small-graph kernel: LN0 -> [W_r|W_l] projection -> mean aggregation ->
# ReLU -> LN1 -> global mean pool, everything resident in VMEM, one grid step.
# --------------------------------------------------------------------------------------
def _fused_small_kernel(x_ref, a_ref, p_ref, deginv_ref, cntinv_ref,
                        ln0w_ref, ln0b_ref, wcat_ref, bl_ref, ln1w_ref, ln1b_ref,
                        out_ref, *, f_in, f_out):
    f_out_pad = out_ref.shape[-1]
    x = x_ref[...].astype(jnp.float32)
    xn = _layernorm_masked(x, ln0w_ref[...], ln0b_ref[...], f_in)

    proj = jnp.dot(xn.astype(jnp.bfloat16), wcat_ref[...],
                   preferred_element_type=jnp.float32)
    proj_r = proj[:, :f_out_pad]
    proj_l = proj[:, f_out_pad:].astype(jnp.bfloat16)

    agg = jnp.dot(a_ref[...], proj_l, preferred_element_type=jnp.float32)
    h = proj_r + agg * deginv_ref[...] + bl_ref[...]
    h = jnp.maximum(h, 0.0)                                   # ReLU
    hn = _layernorm_masked(h, ln1w_ref[...], ln1b_ref[...], f_out)
    # Dropout(p=0.2): eval-mode identity.
    pooled = jnp.dot(p_ref[...], hn.astype(jnp.bfloat16),
                     preferred_element_type=jnp.float32)
    out_ref[...] = pooled * cntinv_ref[...]


# --------------------------------------------------------------------------------------
# Tiled path, stage 1: per-node LayerNorm (masked to true in_feats) + fused projection
#   proj = LN0(x) @ [W_r | W_l]   ->  proj_r (bf16), proj_l (bf16)
# --------------------------------------------------------------------------------------
def _project_kernel(x_ref, ln0w_ref, ln0b_ref, wcat_ref, projr_ref, projl_ref, *, f_in):
    f_out_pad = projr_ref.shape[-1]
    x = x_ref[...].astype(jnp.float32)
    xn = _layernorm_masked(x, ln0w_ref[...], ln0b_ref[...], f_in)
    proj = jnp.dot(xn.astype(jnp.bfloat16), wcat_ref[...],
                   preferred_element_type=jnp.float32)
    projr_ref[...] = proj[:, :f_out_pad].astype(projr_ref.dtype)
    projl_ref[...] = proj[:, f_out_pad:].astype(projl_ref.dtype)


# --------------------------------------------------------------------------------------
# Tiled path, stage 2 (+ fused pooling):
#   acc += A_bin[i,k] @ proj_l[k]                         (bf16 MXU, f32 accumulator)
#   at last k:  h = proj_r + deg_inv*acc + b_l ; ReLU ; LN1 (masked)
#               out += P[:, i] @ h                        (pooled accum, h never hits HBM)
#   at last (i,k): out *= 1/count
# --------------------------------------------------------------------------------------
def _agg_pool_kernel(a_ref, projl_ref, projr_ref, deginv_ref, bl_ref,
                     ln1w_ref, ln1b_ref, p_ref, cntinv_ref,
                     out_ref, acc_ref, *, f_out):
    i = pl.program_id(0)
    k = pl.program_id(1)
    last_i = pl.num_programs(0) - 1
    last_k = pl.num_programs(1) - 1

    @pl.when((i == 0) & (k == 0))
    def _():
        out_ref[...] = jnp.zeros_like(out_ref)

    @pl.when(k == 0)
    def _():
        acc_ref[...] = jnp.zeros_like(acc_ref)

    acc_ref[...] += jnp.dot(a_ref[...], projl_ref[...],
                            preferred_element_type=jnp.float32)

    @pl.when(k == last_k)
    def _():
        h = (projr_ref[...].astype(jnp.float32)
             + acc_ref[...] * deginv_ref[...] + bl_ref[...])
        h = jnp.maximum(h, 0.0)                               # ReLU
        hn = _layernorm_masked(h, ln1w_ref[...], ln1b_ref[...], f_out)
        # Dropout(p=0.2): eval-mode identity.
        out_ref[...] += jnp.dot(p_ref[...], hn.astype(jnp.bfloat16),
                                preferred_element_type=jnp.float32)

    @pl.when((i == last_i) & (k == last_k))
    def _():
        out_ref[...] = out_ref[...] * cntinv_ref[...]


# --------------------------------------------------------------------------------------
# VMEM budgeting / tile selection
# --------------------------------------------------------------------------------------
def _stage2_vmem_estimate(tm, tk, f_out_pad, s_pad):
    return (3 * tm * tk * 2                      # A tiles (up to triple-buffered, bf16)
            + 3 * tk * f_out_pad * 2             # proj_l tiles (bf16)
            + 2 * tm * f_out_pad * 2             # proj_r tiles (bf16)
            + 2 * tm * 4                         # 1/deg
            + 2 * s_pad * tm * 2                 # pooling membership tile (bf16)
            + tm * f_out_pad * 4                 # f32 row accumulator
            + 2 * s_pad * f_out_pad * 4          # pooled output block
            + 8 * f_out_pad * 4 + 2 * s_pad * 4)  # broadcast params


def _pick_tiles(n_pad, f_out_pad, s_pad):
    def pick(cands):
        for t in cands:
            if t <= n_pad and n_pad % t == 0:
                return t
        return n_pad

    tm = pick((1024, 512, 256, 128))             # decoupled row / k tiles
    tk = pick((2048, 1024, 512, 256, 128))
    budget = 28 << 20                            # leave headroom on v7x (64 MiB physical)
    while _stage2_vmem_estimate(tm, tk, f_out_pad, s_pad) > budget and tk > 128:
        tk //= 2
    while _stage2_vmem_estimate(tm, tk, f_out_pad, s_pad) > budget and tm > 128:
        tm //= 2
    return tm, tk, _stage2_vmem_estimate(tm, tk, f_out_pad, s_pad)


def _fused_vmem_estimate(n_pad, f_in_pad, f_out_pad, s_pad):
    return (2 * n_pad * f_in_pad * 4             # x (f32)
            + 2 * n_pad * n_pad * 2              # adjacency (bf16)
            + 2 * s_pad * n_pad * 2              # pooling membership (bf16)
            + 2 * f_in_pad * 2 * f_out_pad * 2   # [W_r | W_l] (bf16)
            + 2 * s_pad * f_out_pad * 4          # output
            + n_pad * f_in_pad * 4               # LN0(x) intermediate
            + n_pad * 2 * f_out_pad * 4          # projection intermediate
            + 2 * n_pad * f_out_pad * 4          # h / LN1(h) intermediates
            + (8 * f_out_pad + 4 * f_in_pad + n_pad + s_pad) * 4)


# --------------------------------------------------------------------------------------
# Wrapper
# --------------------------------------------------------------------------------------
def intra_gcn_forward(x, edge_index, batch, params, num_segments, *, force_tiled=False):
    n, f_in = x.shape
    f_out = params["w_l"].shape[1]

    n_pad = _round_up(max(n, LANE), LANE)
    f_in_pad = _round_up(f_in, LANE)
    f_out_pad = _round_up(f_out, LANE)
    s_pad = _round_up(max(num_segments, 16), 16)

    # ---- host/XLA-side setup: padding + dense binary adjacency / pooling matrices ----
    # TODO(synk): replace this N^2 dense scatter with a CSR build for large sparse graphs.
    x_p = _pad2d(x.astype(jnp.float32), n_pad, f_in_pad)

    src, dst = edge_index[0], edge_index[1]
    a_bin = jnp.zeros((n_pad, n_pad), jnp.float32).at[dst, src].add(1.0)
    deg_inv = 1.0 / jnp.maximum(jnp.sum(a_bin, axis=1, keepdims=True), 1.0)  # exact f32
    a_bin = a_bin.astype(jnp.bfloat16)                                       # 0/1 exact

    p_bin = jnp.zeros((s_pad, n_pad), jnp.float32).at[batch, jnp.arange(n)].add(1.0)
    cnt_inv = 1.0 / jnp.maximum(jnp.sum(p_bin, axis=1, keepdims=True), 1.0)
    p_bin = p_bin.astype(jnp.bfloat16)

    w_cat = jnp.concatenate(
        [_pad2d(params["w_r"].astype(jnp.float32), f_in_pad, f_out_pad),
         _pad2d(params["w_l"].astype(jnp.float32), f_in_pad, f_out_pad)],
        axis=1).astype(jnp.bfloat16)
    b_l = _pad2d(params["b_l"].reshape(1, -1).astype(jnp.float32), 1, f_out_pad)
    ln0w = _pad2d(params["ln0_w"].reshape(1, -1).astype(jnp.float32), 1, f_in_pad)
    ln0b = _pad2d(params["ln0_b"].reshape(1, -1).astype(jnp.float32), 1, f_in_pad)
    ln1w = _pad2d(params["ln1_w"].reshape(1, -1).astype(jnp.float32), 1, f_out_pad)
    ln1b = _pad2d(params["ln1_b"].reshape(1, -1).astype(jnp.float32), 1, f_out_pad)

    fused_est = _fused_vmem_estimate(n_pad, f_in_pad, f_out_pad, s_pad)
    use_fused = (not force_tiled) and n_pad <= FUSE_MAX_NODES and fused_est <= FUSE_MAX_VMEM

    if use_fused:
        # ---------------- small-graph fast path: one fully fused pallas_call ----------
        pooled = pl.pallas_call(
            functools.partial(_fused_small_kernel, f_in=f_in, f_out=f_out),
            out_shape=jax.ShapeDtypeStruct((s_pad, f_out_pad), jnp.float32),
            grid=(1,),
            in_specs=[
                pl.BlockSpec((n_pad, f_in_pad), lambda i: (0, 0)),          # x
                pl.BlockSpec((n_pad, n_pad), lambda i: (0, 0)),             # A_bin
                pl.BlockSpec((s_pad, n_pad), lambda i: (0, 0)),             # P_bin
                pl.BlockSpec((n_pad, 1), lambda i: (0, 0)),                 # 1/deg
                pl.BlockSpec((s_pad, 1), lambda i: (0, 0)),                 # 1/count
                pl.BlockSpec((1, f_in_pad), lambda i: (0, 0)),              # ln0_w
                pl.BlockSpec((1, f_in_pad), lambda i: (0, 0)),              # ln0_b
                pl.BlockSpec((f_in_pad, 2 * f_out_pad), lambda i: (0, 0)),  # [W_r|W_l]
                pl.BlockSpec((1, f_out_pad), lambda i: (0, 0)),             # b_l
                pl.BlockSpec((1, f_out_pad), lambda i: (0, 0)),             # ln1_w
                pl.BlockSpec((1, f_out_pad), lambda i: (0, 0)),             # ln1_b
            ],
            out_specs=pl.BlockSpec((s_pad, f_out_pad), lambda i: (0, 0)),
            compiler_params=pltpu.CompilerParams(
                dimension_semantics=("arbitrary",),
                vmem_limit_bytes=int(fused_est) + (16 << 20)),
        )(x_p, a_bin, p_bin, deg_inv, cnt_inv, ln0w, ln0b, w_cat, b_l, ln1w, ln1b)
        return pooled[:num_segments, :f_out]

    # ---------------- large-graph tiled path ------------------------------------------
    tm, tk, stage2_est = _pick_tiles(n_pad, f_out_pad, s_pad)

    # stage 1: LN0 + fused projection (both outputs bf16 -> halved HBM round trip)
    projr, projl = pl.pallas_call(
        functools.partial(_project_kernel, f_in=f_in),
        out_shape=(jax.ShapeDtypeStruct((n_pad, f_out_pad), jnp.bfloat16),
                   jax.ShapeDtypeStruct((n_pad, f_out_pad), jnp.bfloat16)),
        grid=(n_pad // tm,),
        in_specs=[
            pl.BlockSpec((tm, f_in_pad), lambda i: (i, 0)),
            pl.BlockSpec((1, f_in_pad), lambda i: (0, 0)),
            pl.BlockSpec((1, f_in_pad), lambda i: (0, 0)),
            pl.BlockSpec((f_in_pad, 2 * f_out_pad), lambda i: (0, 0)),
        ],
        out_specs=(pl.BlockSpec((tm, f_out_pad), lambda i: (i, 0)),
                   pl.BlockSpec((tm, f_out_pad), lambda i: (i, 0))),
        compiler_params=pltpu.CompilerParams(dimension_semantics=("parallel",)),
    )(x_p, ln0w, ln0b, w_cat)

    # stage 2 (+ fused stage 3): tiled aggregation + ReLU + LN1 + global mean pool
    nbuf = 3 if (n_pad // tk) >= 3 else None     # extra DMA buffering only on long K grids
    pooled = pl.pallas_call(
        functools.partial(_agg_pool_kernel, f_out=f_out),
        out_shape=jax.ShapeDtypeStruct((s_pad, f_out_pad), jnp.float32),
        grid=(n_pad // tm, n_pad // tk),
        in_specs=[
            _maybe_buffered((tm, tk), lambda i, k: (i, k), nbuf),           # A tile
            _maybe_buffered((tk, f_out_pad), lambda i, k: (k, 0), nbuf),    # proj_l (src)
            pl.BlockSpec((tm, f_out_pad), lambda i, k: (i, 0)),             # proj_r (dst)
            pl.BlockSpec((tm, 1), lambda i, k: (i, 0)),                     # 1/deg
            pl.BlockSpec((1, f_out_pad), lambda i, k: (0, 0)),              # b_l
            pl.BlockSpec((1, f_out_pad), lambda i, k: (0, 0)),              # ln1_w
            pl.BlockSpec((1, f_out_pad), lambda i, k: (0, 0)),              # ln1_b
            pl.BlockSpec((s_pad, tm), lambda i, k: (0, i)),                 # pooling membership
            pl.BlockSpec((s_pad, 1), lambda i, k: (0, 0)),                  # 1/count
        ],
        out_specs=pl.BlockSpec((s_pad, f_out_pad), lambda i, k: (0, 0)),
        scratch_shapes=[pltpu.VMEM((tm, f_out_pad), jnp.float32)],
        compiler_params=pltpu.CompilerParams(
            # Pooled output accumulates across row tiles -> both axes serial on one core.
            # TODO(synk): per-core pooled partials + small reduce to recover v7x 2-TC split.
            dimension_semantics=("arbitrary", "arbitrary"),
            vmem_limit_bytes=int(stage2_est) + (16 << 20)),
    )(a_bin, projl, projr, deg_inv, b_l, ln1w, ln1b, p_bin, cnt_inv)

    return pooled[:num_segments, :f_out]


# --------------------------------------------------------------------------------------
# Pure-JAX reference (f32) for a sanity check
# --------------------------------------------------------------------------------------
def intra_gcn_reference(x, edge_index, batch, params, num_segments):
    def ln(v, w, b):
        mu = jnp.mean(v, axis=-1, keepdims=True)
        var = jnp.mean((v - mu) ** 2, axis=-1, keepdims=True)
        return (v - mu) * lax.rsqrt(var + EPS) * w + b

    n = x.shape[0]
    xn = ln(x, params["ln0_w"], params["ln0_b"])
    src, dst = edge_index[0], edge_index[1]
    agg = jnp.zeros_like(xn).at[dst].add(xn[src])
    deg = jnp.zeros((n, 1), jnp.float32).at[dst, 0].add(1.0)
    agg = agg / jnp.maximum(deg, 1.0)
    h = agg @ params["w_l"] + params["b_l"] + xn @ params["w_r"]
    h = jnp.maximum(h, 0.0)
    h = ln(h, params["ln1_w"], params["ln1_b"])
    pooled = jnp.zeros((num_segments, h.shape[1]), jnp.float32).at[batch].add(h)
    cnt = jnp.zeros((num_segments, 1), jnp.float32).at[batch, 0].add(1.0)
    return pooled / jnp.maximum(cnt, 1.0)


def init_params(key, in_feats, out_feats):
    ks = jax.random.split(key, 3)
    scale = 1.0 / jnp.sqrt(jnp.float32(in_feats))
    return {
        # SAGEConv lin_l (neighbor branch, with bias) and lin_r (root branch, no bias)
        "w_l": jax.random.uniform(ks[0], (in_feats, out_feats), jnp.float32, -scale, scale),
        "b_l": jax.random.uniform(ks[1], (out_feats,), jnp.float32, -scale, scale),
        "w_r": jax.random.uniform(ks[2], (in_feats, out_feats), jnp.float32, -scale, scale),
        # LayerNorm(in_feats) and LayerNorm(n_hidden == out_feats): affine init = (1, 0)
        "ln0_w": jnp.ones((in_feats,), jnp.float32),
        "ln0_b": jnp.zeros((in_feats,), jnp.float32),
        "ln1_w": jnp.ones((out_feats,), jnp.float32),
        "ln1_b": jnp.zeros((out_feats,), jnp.float32),
    }


if __name__ == "__main__":
    key = jax.random.PRNGKey(0)
    k_feat, k_param = jax.random.split(key)

    N_PATCH = 20          # patch-level graph nodes
    IN_FEATS = 48
    OUT_FEATS = 32        # n_hidden == out_feats (required by the module's forward)
    N_SUPERPIXELS = 3     # pooled output rows

    feature = jax.random.normal(k_feat, (N_PATCH, IN_FEATS), jnp.float32)

    # deterministic bidirectional ring graph: data.edge_patch, shape (2, 2N)
    idx = jnp.arange(N_PATCH, dtype=jnp.int32)
    src = jnp.concatenate([idx, (idx + 1) % N_PATCH])
    dst = jnp.concatenate([(idx + 1) % N_PATCH, idx])
    edge_index = jnp.stack([src, dst])

    # data.superpixel_attri: contiguous superpixel assignment of patches
    batch = (idx * N_SUPERPIXELS) // N_PATCH

    params = init_params(k_param, IN_FEATS, OUT_FEATS)

    ref = intra_gcn_reference(feature, edge_index, batch, params, N_SUPERPIXELS)

    # Fused small-graph fast path (the default for this size).
    out_fused = jax.block_until_ready(
        intra_gcn_forward(feature, edge_index, batch, params, N_SUPERPIXELS))
    assert out_fused.shape == (N_SUPERPIXELS, OUT_FEATS)
    assert bool(jnp.all(jnp.isfinite(out_fused)))
    # bf16 MXU path (weights + activations rounded to bf16, f32 accumulation):
    # observed error is ~1e-2 level; 7.5e-2 keeps margin while tighter than before.
    err_fused = float(jnp.max(jnp.abs(out_fused - ref)))
    assert err_fused < 7.5e-2, f"fused path max abs error vs reference: {err_fused}"

    # Also exercise the large-graph tiled path (forced) on the same small problem.
    out_tiled = jax.block_until_ready(
        intra_gcn_forward(feature, edge_index, batch, params, N_SUPERPIXELS,
                          force_tiled=True))
    assert out_tiled.shape == (N_SUPERPIXELS, OUT_FEATS)
    assert bool(jnp.all(jnp.isfinite(out_tiled)))
    err_tiled = float(jnp.max(jnp.abs(out_tiled - ref)))
    assert err_tiled < 7.5e-2, f"tiled path max abs error vs reference: {err_tiled}"

    print("KERNEL_OK")
</pallas_src>

<mosaic_0001>
module attributes {stable_mosaic.version = 11 : i64} {
  func.func @_fused_small_kernel(%arg0: i32, %arg1: memref<128x128xf32, #tpu.memory_space<vmem>>, %arg2: memref<128x128xbf16, #tpu.memory_space<vmem>>, %arg3: memref<16x128xbf16, #tpu.memory_space<vmem>>, %arg4: memref<128x1xf32, #tpu.memory_space<vmem>>, %arg5: memref<16x1xf32, #tpu.memory_space<vmem>>, %arg6: memref<1x128xf32, #tpu.memory_space<vmem>>, %arg7: memref<1x128xf32, #tpu.memory_space<vmem>>, %arg8: memref<128x256xbf16, #tpu.memory_space<vmem>>, %arg9: memref<1x128xf32, #tpu.memory_space<vmem>>, %arg10: memref<1x128xf32, #tpu.memory_space<vmem>>, %arg11: memref<1x128xf32, #tpu.memory_space<vmem>>, %arg12: memref<16x128xf32, #tpu.memory_space<vmem>>) attributes {dimension_semantics = [#tpu.dimension_semantics<arbitrary>], iteration_bounds = array<i64: 1>, scalar_prefetch = 0 : i64, scratch_operands = 0 : i64, tpu.core_type = #tpu.core_type<tc>, window_params = [{pipeline_mode = #tpu.pipeline_mode<synchronous>, transform_indices = @transform_0, window_bounds = array<i64: 128, 128>}, {pipeline_mode = #tpu.pipeline_mode<synchronous>, transform_indices = @transform_1, window_bounds = array<i64: 128, 128>}, {pipeline_mode = #tpu.pipeline_mode<synchronous>, transform_indices = @transform_2, window_bounds = array<i64: 16, 128>}, {pipeline_mode = #tpu.pipeline_mode<synchronous>, transform_indices = @transform_3, window_bounds = array<i64: 128, 1>}, {pipeline_mode = #tpu.pipeline_mode<synchronous>, transform_indices = @transform_4, window_bounds = array<i64: 16, 1>}, {pipeline_mode = #tpu.pipeline_mode<synchronous>, transform_indices = @transform_5, window_bounds = array<i64: 1, 128>}, {pipeline_mode = #tpu.pipeline_mode<synchronous>, transform_indices = @transform_6, window_bounds = array<i64: 1, 128>}, {pipeline_mode = #tpu.pipeline_mode<synchronous>, transform_indices = @transform_7, window_bounds = array<i64: 128, 256>}, {pipeline_mode = #tpu.pipeline_mode<synchronous>, transform_indices = @transform_8, window_bounds = array<i64: 1, 128>}, {pipeline_mode = #tpu.pipeline_mode<synchronous>, transform_indices = @transform_9, window_bounds = array<i64: 1, 128>}, {pipeline_mode = #tpu.pipeline_mode<synchronous>, transform_indices = @transform_10, window_bounds = array<i64: 1, 128>}, {pipeline_mode = #tpu.pipeline_mode<synchronous>, transform_indices = @transform_11, window_bounds = array<i64: 16, 128>}]} {
    %c0 = arith.constant 0 : index
    %c0_0 = arith.constant 0 : index
    %0 = vector.load %arg1[%c0, %c0_0] : memref<128x128xf32, #tpu.memory_space<vmem>>, vector<128x128xf32>
    %c0_1 = arith.constant 0 : index
    %c0_2 = arith.constant 0 : index
    %1 = vector.load %arg6[%c0_1, %c0_2] : memref<1x128xf32, #tpu.memory_space<vmem>>, vector<1x128xf32>
    %c0_3 = arith.constant 0 : index
    %c0_4 = arith.constant 0 : index
    %2 = vector.load %arg7[%c0_3, %c0_4] : memref<1x128xf32, #tpu.memory_space<vmem>>, vector<1x128xf32>
    %3 = tpu.iota {dimensions = array<i32: 1>} : vector<1x128xi32>
    %c48_i32 = arith.constant 48 : i32
    %4 = vector.broadcast %c48_i32 : i32 to vector<1x128xi32>
    %5 = arith.cmpi slt, %3, %4 : vector<1x128xi32>
    %6 = arith.extui %5 : vector<1x128xi1> to vector<1x128xi32>
    %7 = arith.sitofp %6 : vector<1x128xi32> to vector<1x128xf32>
    %cst = arith.constant dense<0.000000e+00> : vector<128xf32>
    %8 = vector.multi_reduction <add>, %0, %cst [1] : vector<128x128xf32> to vector<128xf32>
    %9 = vector.shape_cast %8 : vector<128xf32> to vector<128x1xf32>
    %cst_5 = arith.constant 0.020833334 : f32
    %10 = vector.broadcast %cst_5 : f32 to vector<128x1xf32>
    %11 = arith.mulf %9, %10 : vector<128x1xf32>
    %12 = vector.broadcast %11 : vector<128x1xf32> to vector<128x128xf32>
    %13 = arith.subf %0, %12 : vector<128x128xf32>
    %14 = vector.broadcast %7 : vector<1x128xf32> to vector<128x128xf32>
    %15 = arith.mulf %13, %14 : vector<128x128xf32>
    %16 = arith.mulf %15, %15 : vector<128x128xf32>
    %cst_6 = arith.constant dense<0.000000e+00> : vector<128xf32>
    %17 = vector.multi_reduction <add>, %16, %cst_6 [1] : vector<128x128xf32> to vector<128xf32>
    %18 = vector.shape_cast %17 : vector<128xf32> to vector<128x1xf32>
    %cst_7 = arith.constant 0.020833334 : f32
    %19 = vector.broadcast %cst_7 : f32 to vector<128x1xf32>
    %20 = arith.mulf %18, %19 : vector<128x1xf32>
    %cst_8 = arith.constant 9.99999974E-6 : f32
    %21 = vector.broadcast %cst_8 : f32 to vector<128x1xf32>
    %22 = arith.addf %20, %21 : vector<128x1xf32>
    %23 = math.rsqrt %22 : vector<128x1xf32>
    %24 = vector.broadcast %23 : vector<128x1xf32> to vector<128x128xf32>
    %25 = arith.mulf %15, %24 : vector<128x128xf32>
    %26 = vector.broadcast %1 : vector<1x128xf32> to vector<128x128xf32>
    %27 = arith.mulf %25, %26 : vector<128x128xf32>
    %28 = vector.broadcast %2 : vector<1x128xf32> to vector<128x128xf32>
    %29 = arith.addf %27, %28 : vector<128x128xf32>
    %30 = arith.truncf %29 : vector<128x128xf32> to vector<128x128xbf16>
    %c0_9 = arith.constant 0 : index
    %c0_10 = arith.constant 0 : index
    %31 = vector.load %arg8[%c0_9, %c0_10] : memref<128x256xbf16, #tpu.memory_space<vmem>>, vector<128x256xbf16>
    %cst_11 = arith.constant dense<0.000000e+00> : vector<128x256xf32>
    %32 = tpu.matmul %30, %31, %cst_11 {dimension_numbers = #tpu.dot_dimension_numbers<[1], [0], [0], [1], [0, 0, 1, 1], [], []>} : vector<128x128xbf16>, vector<128x256xbf16>, vector<128x256xf32> -> vector<128x256xf32>
    %33 = vector.extract_strided_slice %32 {offsets = [0, 0], sizes = [128, 128], strides = [1, 1]} : vector<128x256xf32> to vector<128x128xf32>
    %34 = vector.extract_strided_slice %32 {offsets = [0, 128], sizes = [128, 128], strides = [1, 1]} : vector<128x256xf32> to vector<128x128xf32>
    %35 = arith.truncf %34 : vector<128x128xf32> to vector<128x128xbf16>
    %c0_12 = arith.constant 0 : index
    %c0_13 = arith.constant 0 : index
    %36 = vector.load %arg2[%c0_12, %c0_13] : memref<128x128xbf16, #tpu.memory_space<vmem>>, vector<128x128xbf16>
    %cst_14 = arith.constant dense<0.000000e+00> : vector<128x128xf32>
    %37 = tpu.matmul %36, %35, %cst_14 {dimension_numbers = #tpu.dot_dimension_numbers<[1], [0], [0], [1], [0, 0, 1, 1], [], []>} : vector<128x128xbf16>, vector<128x128xbf16>, vector<128x128xf32> -> vector<128x128xf32>
    %c0_15 = arith.constant 0 : index
    %c0_16 = arith.constant 0 : index
    %38 = vector.load %arg4[%c0_15, %c0_16] : memref<128x1xf32, #tpu.memory_space<vmem>>, vector<128x1xf32>
    %39 = vector.broadcast %38 : vector<128x1xf32> to vector<128x128xf32>
    %40 = arith.mulf %37, %39 : vector<128x128xf32>
    %41 = arith.addf %33, %40 : vector<128x128xf32>
    %c0_17 = arith.constant 0 : index
    %c0_18 = arith.constant 0 : index
    %42 = vector.load %arg9[%c0_17, %c0_18] : memref<1x128xf32, #tpu.memory_space<vmem>>, vector<1x128xf32>
    %43 = vector.broadcast %42 : vector<1x128xf32> to vector<128x128xf32>
    %44 = arith.addf %41, %43 : vector<128x128xf32>
    %cst_19 = arith.constant 0.000000e+00 : f32
    %45 = vector.broadcast %cst_19 : f32 to vector<128x128xf32>
    %46 = arith.maximumf %44, %45 : vector<128x128xf32>
    %c0_20 = arith.constant 0 : index
    %c0_21 = arith.constant 0 : index
    %47 = vector.load %arg10[%c0_20, %c0_21] : memref<1x128xf32, #tpu.memory_space<vmem>>, vector<1x128xf32>
    %c0_22 = arith.constant 0 : index
    %c0_23 = arith.constant 0 : index
    %48 = vector.load %arg11[%c0_22, %c0_23] : memref<1x128xf32, #tpu.memory_space<vmem>>, vector<1x128xf32>
    %49 = tpu.iota {dimensions = array<i32: 1>} : vector<1x128xi32>
    %c32_i32 = arith.constant 32 : i32
    %50 = vector.broadcast %c32_i32 : i32 to vector<1x128xi32>
    %51 = arith.cmpi slt, %49, %50 : vector<1x128xi32>
    %52 = arith.extui %51 : vector<1x128xi1> to vector<1x128xi32>
    %53 = arith.sitofp %52 : vector<1x128xi32> to vector<1x128xf32>
    %cst_24 = arith.constant dense<0.000000e+00> : vector<128xf32>
    %54 = vector.multi_reduction <add>, %46, %cst_24 [1] : vector<128x128xf32> to vector<128xf32>
    %55 = vector.shape_cast %54 : vector<128xf32> to vector<128x1xf32>
    %cst_25 = arith.constant 3.125000e-02 : f32
    %56 = vector.broadcast %cst_25 : f32 to vector<128x1xf32>
    %57 = arith.mulf %55, %56 : vector<128x1xf32>
    %58 = vector.broadcast %57 : vector<128x1xf32> to vector<128x128xf32>
    %59 = arith.subf %46, %58 : vector<128x128xf32>
    %60 = vector.broadcast %53 : vector<1x128xf32> to vector<128x128xf32>
    %61 = arith.mulf %59, %60 : vector<128x128xf32>
    %62 = arith.mulf %61, %61 : vector<128x128xf32>
    %cst_26 = arith.constant dense<0.000000e+00> : vector<128xf32>
    %63 = vector.multi_reduction <add>, %62, %cst_26 [1] : vector<128x128xf32> to vector<128xf32>
    %64 = vector.shape_cast %63 : vector<128xf32> to vector<128x1xf32>
    %cst_27 = arith.constant 3.125000e-02 : f32
    %65 = vector.broadcast %cst_27 : f32 to vector<128x1xf32>
    %66 = arith.mulf %64, %65 : vector<128x1xf32>
    %cst_28 = arith.constant 9.99999974E-6 : f32
    %67 = vector.broadcast %cst_28 : f32 to vector<128x1xf32>
    %68 = arith.addf %66, %67 : vector<128x1xf32>
    %69 = math.rsqrt %68 : vector<128x1xf32>
    %70 = vector.broadcast %69 : vector<128x1xf32> to vector<128x128xf32>
    %71 = arith.mulf %61, %70 : vector<128x128xf32>
    %72 = vector.broadcast %47 : vector<1x128xf32> to vector<128x128xf32>
    %73 = arith.mulf %71, %72 : vector<128x128xf32>
    %74 = vector.broadcast %48 : vector<1x128xf32> to vector<128x128xf32>
    %75 = arith.addf %73, %74 : vector<128x128xf32>
    %c0_29 = arith.constant 0 : index
    %c0_30 = arith.constant 0 : index
    %76 = vector.load %arg3[%c0_29, %c0_30] : memref<16x128xbf16, #tpu.memory_space<vmem>>, vector<16x128xbf16>
    %77 = arith.truncf %75 : vector<128x128xf32> to vector<128x128xbf16>
    %cst_31 = arith.constant dense<0.000000e+00> : vector<16x128xf32>
    %78 = tpu.matmul %76, %77, %cst_31 {dimension_numbers = #tpu.dot_dimension_numbers<[1], [0], [0], [1], [0, 0, 1, 1], [], []>} : vector<16x128xbf16>, vector<128x128xbf16>, vector<16x128xf32> -> vector<16x128xf32>
    %c0_32 = arith.constant 0 : index
    %c0_33 = arith.constant 0 : index
    %79 = vector.load %arg5[%c0_32, %c0_33] : memref<16x1xf32, #tpu.memory_space<vmem>>, vector<16x1xf32>
    %80 = vector.broadcast %79 : vector<16x1xf32> to vector<16x128xf32>
    %81 = arith.mulf %78, %80 : vector<16x128xf32>
    %c0_34 = arith.constant 0 : index
    %c0_35 = arith.constant 0 : index
    %82 = vector.load %arg12[%c0_34, %c0_35] : memref<16x128xf32, #tpu.memory_space<vmem>>, vector<16x128xf32>
    tpu.vector_store %arg12[%c0_34, %c0_35], %81 {strides = array<i32>} : memref<16x128xf32, #tpu.memory_space<vmem>>, vector<16x128xf32>,
    return
  }
  func.func @transform_0(%arg0: i32) -> (i32, i32) {
    %c0_i32 = arith.constant 0 : i32
    %c0_i32_0 = arith.constant 0 : i32
    %c0_i32_1 = arith.constant 0 : i32
    return %c0_i32, %c0_i32_0 : i32, i32
  }
  func.func @transform_1(%arg0: i32) -> (i32, i32) {
    %c0_i32 = arith.constant 0 : i32
    %c0_i32_0 = arith.constant 0 : i32
    %c0_i32_1 = arith.constant 0 : i32
    return %c0_i32, %c0_i32_0 : i32, i32
  }
  func.func @transform_2(%arg0: i32) -> (i32, i32) {
    %c0_i32 = arith.constant 0 : i32
    %c0_i32_0 = arith.constant 0 : i32
    %c0_i32_1 = arith.constant 0 : i32
    return %c0_i32, %c0_i32_0 : i32, i32
  }
  func.func @transform_3(%arg0: i32) -> (i32, i32) {
    %c0_i32 = arith.constant 0 : i32
    %c0_i32_0 = arith.constant 0 : i32
    %c0_i32_1 = arith.constant 0 : i32
    return %c0_i32, %c0_i32_0 : i32, i32
  }
  func.func @transform_4(%arg0: i32) -> (i32, i32) {
    %c0_i32 = arith.constant 0 : i32
    %c0_i32_0 = arith.constant 0 : i32
    %c0_i32_1 = arith.constant 0 : i32
    return %c0_i32, %c0_i32_0 : i32, i32
  }
  func.func @transform_5(%arg0: i32) -> (i32, i32) {
    %c0_i32 = arith.constant 0 : i32
    %c0_i32_0 = arith.constant 0 : i32
    %c0_i32_1 = arith.constant 0 : i32
    return %c0_i32, %c0_i32_0 : i32, i32
  }
  func.func @transform_6(%arg0: i32) -> (i32, i32) {
    %c0_i32 = arith.constant 0 : i32
    %c0_i32_0 = arith.constant 0 : i32
    %c0_i32_1 = arith.constant 0 : i32
    return %c0_i32, %c0_i32_0 : i32, i32
  }
  func.func @transform_7(%arg0: i32) -> (i32, i32) {
    %c0_i32 = arith.constant 0 : i32
    %c0_i32_0 = arith.constant 0 : i32
    %c0_i32_1 = arith.constant 0 : i32
    return %c0_i32, %c0_i32_0 : i32, i32
  }
  func.func @transform_8(%arg0: i32) -> (i32, i32) {
    %c0_i32 = arith.constant 0 : i32
    %c0_i32_0 = arith.constant 0 : i32
    %c0_i32_1 = arith.constant 0 : i32
    return %c0_i32, %c0_i32_0 : i32, i32
  }
  func.func @transform_9(%arg0: i32) -> (i32, i32) {
    %c0_i32 = arith.constant 0 : i32
    %c0_i32_0 = arith.constant 0 : i32
    %c0_i32_1 = arith.constant 0 : i32
    return %c0_i32, %c0_i32_0 : i32, i32
  }
  func.func @transform_10(%arg0: i32) -> (i32, i32) {
    %c0_i32 = arith.constant 0 : i32
    %c0_i32_0 = arith.constant 0 : i32
    %c0_i32_1 = arith.constant 0 : i32
    return %c0_i32, %c0_i32_0 : i32, i32
  }
  func.func @transform_11(%arg0: i32) -> (i32, i32) {
    %c0_i32 = arith.constant 0 : i32
    %c0_i32_0 = arith.constant 0 : i32
    %c0_i32_1 = arith.constant 0 : i32
    return %c0_i32, %c0_i32_0 : i32, i32
  }
}

</mosaic_0001>

<llo_original>
// kernel: tpu_custom_call.1
$region0: #{tpu_custom_call.1}
  #allocation0 [shape = 'u32[]', space=smem, size = 0x4, offset = 0x4, fixed_abs, tag = 'smem constant byte address 0x4 - core index']
  #allocation1 [shape = 'u32[144,128]{1,0:T(1,128)}', space=vmem, size = 0x12000, scoped, tag = 'internal scratch']
  %s0 = inlined_call_operand.vmem [shape: f32[128,128], index: 0, kind: input, shape index: {}]
  %s1 = inlined_call_operand.hbm [shape: bf16[128,128], index: 1, kind: input, shape index: {}]
  %s2 = inlined_call_operand.vmem [shape: bf16[16,128], index: 2, kind: input, shape index: {}]
  %s3 = inlined_call_operand.vmem [shape: f32[128,1], index: 3, kind: input, shape index: {}]
  %s4 = inlined_call_operand.vmem [shape: f32[16,1], index: 4, kind: input, shape index: {}]
  %s5 = inlined_call_operand.vmem [shape: f32[1,128], index: 5, kind: input, shape index: {}]
  %s6 = inlined_call_operand.vmem [shape: f32[1,128], index: 6, kind: input, shape index: {}]
  %s7 = inlined_call_operand.hbm [shape: bf16[128,256], index: 7, kind: input, shape index: {}]
  %s8 = inlined_call_operand.vmem [shape: f32[1,128], index: 8, kind: input, shape index: {}]
  %s9 = inlined_call_operand.vmem [shape: f32[1,128], index: 9, kind: input, shape index: {}]
  %s10 = inlined_call_operand.vmem [shape: f32[1,128], index: 10, kind: input, shape index: {}]
  %s11 = inlined_call_operand.hbm [shape: f32[16,128], index: 11, kind: output, shape index: {}]
  %s12 = sld [smem:[#allocation0]]
  $region62: #{tpu_custom_call.1} parent=0
    _
  %s14 = ssub.s32 1, %s12
  %s15 = scalar_select 0, %s14, %s12
  $region1: #{tpu_custom_call.1} parent=0
    #allocation2 [shape = 'u8[32768]{0}', space=vmem, size = 0x8000, scoped, tag = 'input window, operand 1, single buffered']
    #allocation3 [shape = 's32[1]{0}', space=sflag, size = 0x4, scoped, tag = 'scoped memory for tpu_custom_call.1']
    #allocation4 [shape = 's32[1]{0}', space=sflag, size = 0x4, scoped, tag = 'scoped memory for tpu_custom_call.1']
    #allocation5 [shape = 'u8[65536]{0}', space=vmem, size = 0x10000, scoped, tag = 'input window, operand 7, single buffered']
    #allocation6 [shape = 's32[1]{0}', space=sflag, size = 0x4, scoped, tag = 'scoped memory for tpu_custom_call.1']
    #allocation7 [shape = 'u8[8192]{0}', space=vmem, size = 0x2000, scoped, tag = 'output window, operand 0, single buffered']
    %16 = vsyncpa [#allocation3], 0
    %17 = vsyncpa [#allocation6], 0
    %18 = vsyncpa [#allocation4], 0
    // Predicated region
    $region2: #{tpu_custom_call.1} parent=1 // pred_check
      _
    $region3: #{tpu_custom_call.1} parent=1 // pred_check_branch
      %20 = sbr.rel (0) target = $region5
    $region4: #{tpu_custom_call.1} parent=1 // pred_region
      _
    $region5: #{tpu_custom_call.1} parent=1 // pred_fallthru
      _
    // Predicated region
    $region6: #{tpu_custom_call.1} parent=1 // pred_check
      _
    $region7: #{tpu_custom_call.1} parent=1 // pred_check_branch
      %22 = sbr.rel (0) target = $region9
    $region8: #{tpu_custom_call.1} parent=1 // pred_region
      %s24 = ssub.s32 1024, 1024
      %25 = vsyncadd [#allocation3], %s24
      %s26 = sshll.u32 [#allocation2], 4
      %s27 = int_to_ptr.vmem [resolvable:$true] %s26
      %32 = dma.hbm_to_vmem [thread:$0]  %s1, 1024, %s27, [#allocation3], 64, 64, 4
    $region9: #{tpu_custom_call.1} parent=1 // pred_fallthru
      _
    // Predicated region
    $region10: #{tpu_custom_call.1} parent=1 // pred_check
      _
    $region11: #{tpu_custom_call.1} parent=1 // pred_check_branch
      %34 = sbr.rel (0) target = $region13
    $region12: #{tpu_custom_call.1} parent=1 // pred_region
      _
    $region13: #{tpu_custom_call.1} parent=1 // pred_fallthru
      _
    // Predicated region
    $region14: #{tpu_custom_call.1} parent=1 // pred_check
      _
    $region15: #{tpu_custom_call.1} parent=1 // pred_check_branch
      %36 = sbr.rel (0) target = $region17
    $region16: #{tpu_custom_call.1} parent=1 // pred_region
      _
    $region17: #{tpu_custom_call.1} parent=1 // pred_fallthru
      _
    // Predicated region
    $region18: #{tpu_custom_call.1} parent=1 // pred_check
      _
    $region19: #{tpu_custom_call.1} parent=1 // pred_check_branch
      %38 = sbr.rel (0) target = $region21
    $region20: #{tpu_custom_call.1} parent=1 // pred_region
      _
    $region21: #{tpu_custom_call.1} parent=1 // pred_fallthru
      _
    // Predicated region
    $region22: #{tpu_custom_call.1} parent=1 // pred_check
      _
    $region23: #{tpu_custom_call.1} parent=1 // pred_check_branch
      %40 = sbr.rel (0) target = $region25
    $region24: #{tpu_custom_call.1} parent=1 // pred_region
      _
    $region25: #{tpu_custom_call.1} parent=1 // pred_fallthru
      _
    // Predicated region
    $region26: #{tpu_custom_call.1} parent=1 // pred_check
      _
    $region27: #{tpu_custom_call.1} parent=1 // pred_check_branch
      %42 = sbr.rel (0) target = $region29
    $region28: #{tpu_custom_call.1} parent=1 // pred_region
      _
    $region29: #{tpu_custom_call.1} parent=1 // pred_fallthru
      _
    // Predicated region
    $region30: #{tpu_custom_call.1} parent=1 // pred_check
      _
    $region31: #{tpu_custom_call.1} parent=1 // pred_check_branch
      %44 = sbr.rel (0) target = $region33
    $region32: #{tpu_custom_call.1} parent=1 // pred_region
      %s46 = ssub.s32 2048, 2048
      %47 = vsyncadd [#allocation6], %s46
      %s48 = sshll.u32 [#allocation5], 4
      %s49 = int_to_ptr.vmem [resolvable:$true] %s48
      %54 = dma.hbm_to_vmem [thread:$0]  %s7, 2048, %s49, [#allocation6], 128, 128, 8
    $region33: #{tpu_custom_call.1} parent=1 // pred_fallthru
      _
    // Predicated region
    $region34: #{tpu_custom_call.1} parent=1 // pred_check
      _
    $region35: #{tpu_custom_call.1} parent=1 // pred_check_branch
      %56 = sbr.rel (0) target = $region37
    $region36: #{tpu_custom_call.1} parent=1 // pred_region
      _
    $region37: #{tpu_custom_call.1} parent=1 // pred_fallthru
      _
    // Predicated region
    $region38: #{tpu_custom_call.1} parent=1 // pred_check
      _
    $region39: #{tpu_custom_call.1} parent=1 // pred_check_branch
      %58 = sbr.rel (0) target = $region41
    $region40: #{tpu_custom_call.1} parent=1 // pred_region
      _
    $region41: #{tpu_custom_call.1} parent=1 // pred_fallthru
      _
    // Predicated region
    $region42: #{tpu_custom_call.1} parent=1 // pred_check
      _
    $region43: #{tpu_custom_call.1} parent=1 // pred_check_branch
      %60 = sbr.rel (0) target = $region45
    $region44: #{tpu_custom_call.1} parent=1 // pred_region
      _
    $region45: #{tpu_custom_call.1} parent=1 // pred_fallthru
      _
    // Predicated region
    $region46: #{tpu_custom_call.1} parent=1 // pred_check
      _
    $region47: #{tpu_custom_call.1} parent=1 // pred_check_branch
      %62 = sbr.rel (0) target = $region49
    $region48: #{tpu_custom_call.1} parent=1 // pred_region
      %63 = dma.done [#allocation3], 1024
    $region49: #{tpu_custom_call.1} parent=1 // pred_fallthru
      _
    // Predicated region
    $region50: #{tpu_custom_call.1} parent=1 // pred_check
      _
    $region51: #{tpu_custom_call.1} parent=1 // pred_check_branch
      %65 = sbr.rel (0) target = $region53
    $region52: #{tpu_custom_call.1} parent=1 // pred_region
      %66 = dma.done [#allocation6], 2048
    $region53: #{tpu_custom_call.1} parent=1 // pred_fallthru
      _
    %v68 = vld [vmem:[%s0] sm:$0xff]
    %v69 = vld [vmem:[%s0 + $0x8] sm:$0xff]
    %v70 = vld [vmem:[%s0 + $0x10] sm:$0xff]
    %v71 = vld [vmem:[%s0 + $0x18] sm:$0xff]
    %v72 = vld [vmem:[%s0 + $0x20] sm:$0xff]
    %v73 = vld [vmem:[%s0 + $0x28] sm:$0xff]
    %v74 = vld [vmem:[%s0 + $0x30] sm:$0xff]
    %v75 = vld [vmem:[%s0 + $0x38] sm:$0xff]
    %v76 = vld [vmem:[%s0 + $0x40] sm:$0xff]
    %v77 = vld [vmem:[%s0 + $0x48] sm:$0xff]
    %v78 = vld [vmem:[%s0 + $0x50] sm:$0xff]
    %v79 = vld [vmem:[%s0 + $0x58] sm:$0xff]
    %v80 = vld [vmem:[%s0 + $0x60] sm:$0xff]
    %v81 = vld [vmem:[%s0 + $0x68] sm:$0xff]
    %v82 = vld [vmem:[%s0 + $0x70] sm:$0xff]
    %v83 = vld [vmem:[%s0 + $0x78] sm:$0xff]
    %v84 = vld [vmem:[%s5] sm:$0x1]
    %v85 = vld [vmem:[%s6] sm:$0x1]
    %v86 = vlaneseq
    %v87 = vand.u32 %v86, 127
    %vm88 = vcmp.lt.s32.totalorder %v87, 48
    %v89 = vsel %vm88, 1, 0
    %v90 = vcvt.s32.f32 %v89
    %91 = vadd.xlane.f32.xlu0 %v68
    %v92 = vpop.xlane.xlu0 %91
    %93 = vadd.xlane.f32.xlu0 %v69
    %v94 = vpop.xlane.xlu0 %93
    %95 = vadd.xlane.f32.xlu0 %v70
    %v96 = vpop.xlane.xlu0 %95
    %97 = vadd.xlane.f32.xlu0 %v71
    %v98 = vpop.xlane.xlu0 %97
    %99 = vadd.xlane.f32.xlu0 %v72
    %v100 = vpop.xlane.xlu0 %99
    %101 = vadd.xlane.f32.xlu0 %v73
    %v102 = vpop.xlane.xlu0 %101
    %103 = vadd.xlane.f32.xlu0 %v74
    %v104 = vpop.xlane.xlu0 %103
    %105 = vadd.xlane.f32.xlu0 %v75
    %v106 = vpop.xlane.xlu0 %105
    %107 = vadd.xlane.f32.xlu0 %v76
    %v108 = vpop.xlane.xlu0 %107
    %109 = vadd.xlane.f32.xlu0 %v77
    %v110 = vpop.xlane.xlu0 %109
    %111 = vadd.xlane.f32.xlu0 %v78
    %v112 = vpop.xlane.xlu0 %111
    %113 = vadd.xlane.f32.xlu0 %v79
    %v114 = vpop.xlane.xlu0 %113
    %115 = vadd.xlane.f32.xlu0 %v80
    %v116 = vpop.xlane.xlu0 %115
    %117 = vadd.xlane.f32.xlu0 %v81
    %v118 = vpop.xlane.xlu0 %117
    %119 = vadd.xlane.f32.xlu0 %v82
    %v120 = vpop.xlane.xlu0 %119
    %121 = vadd.xlane.f32.xlu0 %v83
    %v122 = vpop.xlane.xlu0 %121
    %v123 = vmul.f32 %v92, 0.020833334
    %v124 = vmul.f32 %v94, 0.020833334
    %v125 = vmul.f32 %v96, 0.020833334
    %v126 = vmul.f32 %v98, 0.020833334
    %v127 = vmul.f32 %v100, 0.020833334
    %v128 = vmul.f32 %v102, 0.020833334
    %v129 = vmul.f32 %v104, 0.020833334
    %v130 = vmul.f32 %v106, 0.020833334
    %v131 = vmul.f32 %v108, 0.020833334
    %v132 = vmul.f32 %v110, 0.020833334
    %v133 = vmul.f32 %v112, 0.020833334
    %v134 = vmul.f32 %v114, 0.020833334
    %v135 = vmul.f32 %v116, 0.020833334
    %v136 = vmul.f32 %v118, 0.020833334
    %v137 = vmul.f32 %v120, 0.020833334
    %v138 = vmul.f32 %v122, 0.020833334
    %v139 = vsub.f32 %v68, %v123
    %v140 = vsub.f32 %v69, %v124
    %v141 = vsub.f32 %v70, %v125
    %v142 = vsub.f32 %v71, %v126
    %v143 = vsub.f32 %v72, %v127
    %v144 = vsub.f32 %v73, %v128
    %v145 = vsub.f32 %v74, %v129
    %v146 = vsub.f32 %v75, %v130
    %v147 = vsub.f32 %v76, %v131
    %v148 = vsub.f32 %v77, %v132
    %v149 = vsub.f32 %v78, %v133
    %v150 = vsub.f32 %v79, %v134
    %v151 = vsub.f32 %v80, %v135
    %v152 = vsub.f32 %v81, %v136
    %v153 = vsub.f32 %v82, %v137
    %v154 = vsub.f32 %v83, %v138
    %v155 = vmul.f32 %v139, %v90
    %v156 = vmul.f32 %v140, %v90
    %v157 = vmul.f32 %v141, %v90
    %v158 = vmul.f32 %v142, %v90
    %v159 = vmul.f32 %v143, %v90
    %v160 = vmul.f32 %v144, %v90
    %v161 = vmul.f32 %v145, %v90
    %v162 = vmul.f32 %v146, %v90
    %v163 = vmul.f32 %v147, %v90
    %v164 = vmul.f32 %v148, %v90
    %v165 = vmul.f32 %v149, %v90
    %v166 = vmul.f32 %v150, %v90
    %v167 = vmul.f32 %v151, %v90
    %v168 = vmul.f32 %v152, %v90
    %v169 = vmul.f32 %v153, %v90
    %v170 = vmul.f32 %v154, %v90
    %v171 = vmul.f32 %v155, %v155
    %v172 = vmul.f32 %v156, %v156
    %v173 = vmul.f32 %v157, %v157
    %v174 = vmul.f32 %v158, %v158
    %v175 = vmul.f32 %v159, %v159
    %v176 = vmul.f32 %v160, %v160
    %v177 = vmul.f32 %v161, %v161
    %v178 = vmul.f32 %v162, %v162
    %v179 = vmul.f32 %v163, %v163
    %v180 = vmul.f32 %v164, %v164
    %v181 = vmul.f32 %v165, %v165
    %v182 = vmul.f32 %v166, %v166
    %v183 = vmul.f32 %v167, %v167
    %v184 = vmul.f32 %v168, %v168
    %v185 = vmul.f32 %v169, %v169
    %v186 = vmul.f32 %v170, %v170
    %187 = vadd.xlane.f32.xlu0 %v171
    %v188 = vpop.xlane.xlu0 %187
    %189 = vadd.xlane.f32.xlu0 %v172
    %v190 = vpop.xlane.xlu0 %189
    %191 = vadd.xlane.f32.xlu0 %v173
    %v192 = vpop.xlane.xlu0 %191
    %193 = vadd.xlane.f32.xlu0 %v174
    %v194 = vpop.xlane.xlu0 %193
    %195 = vadd.xlane.f32.xlu0 %v175
    %v196 = vpop.xlane.xlu0 %195
    %197 = vadd.xlane.f32.xlu0 %v176
    %v198 = vpop.xlane.xlu0 %197
    %199 = vadd.xlane.f32.xlu0 %v177
    %v200 = vpop.xlane.xlu0 %199
    %201 = vadd.xlane.f32.xlu0 %v178
    %v202 = vpop.xlane.xlu0 %201
    %203 = vadd.xlane.f32.xlu0 %v179
    %v204 = vpop.xlane.xlu0 %203
    %205 = vadd.xlane.f32.xlu0 %v180
    %v206 = vpop.xlane.xlu0 %205
    %207 = vadd.xlane.f32.xlu0 %v181
    %v208 = vpop.xlane.xlu0 %207
    %209 = vadd.xlane.f32.xlu0 %v182
    %v210 = vpop.xlane.xlu0 %209
    %211 = vadd.xlane.f32.xlu0 %v183
    %v212 = vpop.xlane.xlu0 %211
    %213 = vadd.xlane.f32.xlu0 %v184
    %v214 = vpop.xlane.xlu0 %213
    %215 = vadd.xlane.f32.xlu0 %v185
    %v216 = vpop.xlane.xlu0 %215
    %217 = vadd.xlane.f32.xlu0 %v186
    %v218 = vpop.xlane.xlu0 %217
    %v219 = vmul.f32 %v188, 0.020833334
    %v220 = vmul.f32 %v190, 0.020833334
    %v221 = vmul.f32 %v192, 0.020833334
    %v222 = vmul.f32 %v194, 0.020833334
    %v223 = vmul.f32 %v196, 0.020833334
    %v224 = vmul.f32 %v198, 0.020833334
    %v225 = vmul.f32 %v200, 0.020833334
    %v226 = vmul.f32 %v202, 0.020833334
    %v227 = vmul.f32 %v204, 0.020833334
    %v228 = vmul.f32 %v206, 0.020833334
    %v229 = vmul.f32 %v208, 0.020833334
    %v230 = vmul.f32 %v210, 0.020833334
    %v231 = vmul.f32 %v212, 0.020833334
    %v232 = vmul.f32 %v214, 0.020833334
    %v233 = vmul.f32 %v216, 0.020833334
    %v234 = vmul.f32 %v218, 0.020833334
    %v235 = vadd.f32 %v219, 1e-05
    %v236 = vadd.f32 %v220, 1e-05
    %v237 = vadd.f32 %v221, 1e-05
    %v238 = vadd.f32 %v222, 1e-05
    %v239 = vadd.f32 %v223, 1e-05
    %v240 = vadd.f32 %v224, 1e-05
    %v241 = vadd.f32 %v225, 1e-05
    %v242 = vadd.f32 %v226, 1e-05
    %v243 = vadd.f32 %v227, 1e-05
    %v244 = vadd.f32 %v228, 1e-05
    %v245 = vadd.f32 %v229, 1e-05
    %v246 = vadd.f32 %v230, 1e-05
    %v247 = vadd.f32 %v231, 1e-05
    %v248 = vadd.f32 %v232, 1e-05
    %v249 = vadd.f32 %v233, 1e-05
    %v250 = vadd.f32 %v234, 1e-05
    %v251 = vrsqrt.pop %v235
    %v252 = vrsqrt.pop %v236
    %v253 = vrsqrt.pop %v237
    %v254 = vrsqrt.pop %v238
    %v255 = vrsqrt.pop %v239
    %v256 = vrsqrt.pop %v240
    %v257 = vrsqrt.pop %v241
    %v258 = vrsqrt.pop %v242
    %v259 = vrsqrt.pop %v243
    %v260 = vrsqrt.pop %v244
    %v261 = vrsqrt.pop %v245
    %v262 = vrsqrt.pop %v246
    %v263 = vrsqrt.pop %v247
    %v264 = vrsqrt.pop %v248
    %v265 = vrsqrt.pop %v249
    %v266 = vrsqrt.pop %v250
    %v267 = vmul.f32 %v155, %v251
    %v268 = vmul.f32 %v156, %v252
    %v269 = vmul.f32 %v157, %v253
    %v270 = vmul.f32 %v158, %v254
    %v271 = vmul.f32 %v159, %v255
    %v272 = vmul.f32 %v160, %v256
    %v273 = vmul.f32 %v161, %v257
    %v274 = vmul.f32 %v162, %v258
    %v275 = vmul.f32 %v163, %v259
    %v276 = vmul.f32 %v164, %v260
    %v277 = vmul.f32 %v165, %v261
    %v278 = vmul.f32 %v166, %v262
    %v279 = vmul.f32 %v167, %v263
    %v280 = vmul.f32 %v168, %v264
    %v281 = vmul.f32 %v169, %v265
    %v282 = vmul.f32 %v170, %v266
    %v284 = vlaneseq
    %v285 = vshrl.u32 %v284, 7
    %v286 = vsub.s32 0, %v285
    %v287 = vrot.slane %v84, %v286
    %v289 = vmul.f32 %v267, %v287
    %v290 = vmul.f32 %v268, %v287
    %v291 = vmul.f32 %v269, %v287
    %v292 = vmul.f32 %v270, %v287
    %v293 = vmul.f32 %v271, %v287
    %v294 = vmul.f32 %v272, %v287
    %v295 = vmul.f32 %v273, %v287
    %v296 = vmul.f32 %v274, %v287
    %v297 = vmul.f32 %v275, %v287
    %v298 = vmul.f32 %v276, %v287
    %v299 = vmul.f32 %v277, %v287
    %v300 = vmul.f32 %v278, %v287
    %v301 = vmul.f32 %v279, %v287
    %v302 = vmul.f32 %v280, %v287
    %v303 = vmul.f32 %v281, %v287
    %v304 = vmul.f32 %v282, %v287
    %v306 = vlaneseq
    %v307 = vshrl.u32 %v306, 7
    %v308 = vsub.s32 0, %v307
    %v309 = vrot.slane %v85, %v308
    %v311 = vadd.f32 %v289, %v309
    %v312 = vadd.f32 %v290, %v309
    %v313 = vadd.f32 %v291, %v309
    %v314 = vadd.f32 %v292, %v309
    %v315 = vadd.f32 %v293, %v309
    %v316 = vadd.f32 %v294, %v309
    %v317 = vadd.f32 %v295, %v309
    %v318 = vadd.f32 %v296, %v309
    %v319 = vadd.f32 %v297, %v309
    %v320 = vadd.f32 %v298, %v309
    %v321 = vadd.f32 %v299, %v309
    %v322 = vadd.f32 %v300, %v309
    %v323 = vadd.f32 %v301, %v309
    %v324 = vadd.f32 %v302, %v309
    %v325 = vadd.f32 %v303, %v309
    %v326 = vadd.f32 %v304, %v309
    %v327 = vpack.c.bf16 %v312, %v311
    %v328 = vpack.c.bf16 %v314, %v313
    %v329 = vpack.c.bf16 %v316, %v315
    %v330 = vpack.c.bf16 %v318, %v317
    %v331 = vpack.c.bf16 %v320, %v319
    %v332 = vpack.c.bf16 %v322, %v321
    %v333 = vpack.c.bf16 %v324, %v323
    %v334 = vpack.c.bf16 %v326, %v325
    %v335 = vld [vmem:[#allocation5] sm:$0xff]
    %v336 = vld [vmem:[#allocation5 + $0x8] sm:$0xff]
    %v337 = vld [vmem:[#allocation5 + $0x10] sm:$0xff]
    %v338 = vld [vmem:[#allocation5 + $0x18] sm:$0xff]
    %v339 = vld [vmem:[#allocation5 + $0x20] sm:$0xff]
    %v340 = vld [vmem:[#allocation5 + $0x28] sm:$0xff]
    %v341 = vld [vmem:[#allocation5 + $0x30] sm:$0xff]
    %v342 = vld [vmem:[#allocation5 + $0x38] sm:$0xff]
    %v343 = vld [vmem:[#allocation5 + $0x40] sm:$0xff]
    %v344 = vld [vmem:[#allocation5 + $0x48] sm:$0xff]
    %v345 = vld [vmem:[#allocation5 + $0x50] sm:$0xff]
    %v346 = vld [vmem:[#allocation5 + $0x58] sm:$0xff]
    %v347 = vld [vmem:[#allocation5 + $0x60] sm:$0xff]
    %v348 = vld [vmem:[#allocation5 + $0x68] sm:$0xff]
    %v349 = vld [vmem:[#allocation5 + $0x70] sm:$0xff]
    %v350 = vld [vmem:[#allocation5 + $0x78] sm:$0xff]
    %v367 = vunpack.c.l.b16 %v335
    %v368 = vunpack.c.h.b16 %v335
    %v369 = vunpack.c.l.b16 %v336
    %v370 = vunpack.c.h.b16 %v336
    %v371 = vunpack.c.l.b16 %v337
    %v372 = vunpack.c.h.b16 %v337
    %v373 = vunpack.c.l.b16 %v338
    %v374 = vunpack.c.h.b16 %v338
    %v375 = vunpack.c.l.b16 %v339
    %v376 = vunpack.c.h.b16 %v339
    %v377 = vunpack.c.l.b16 %v340
    %v378 = vunpack.c.h.b16 %v340
    %v379 = vunpack.c.l.b16 %v341
    %v380 = vunpack.c.h.b16 %v341
    %v381 = vunpack.c.l.b16 %v342
    %v382 = vunpack.c.h.b16 %v342
    %v383 = vunpack.c.l.b16 %v343
    %v384 = vunpack.c.h.b16 %v343
    %v385 = vunpack.c.l.b16 %v344
    %v386 = vunpack.c.h.b16 %v344
    %v387 = vunpack.c.l.b16 %v345
    %v388 = vunpack.c.h.b16 %v345
    %v389 = vunpack.c.l.b16 %v346
    %v390 = vunpack.c.h.b16 %v346
    %v391 = vunpack.c.l.b16 %v347
    %v392 = vunpack.c.h.b16 %v347
    %v393 = vunpack.c.l.b16 %v348
    %v394 = vunpack.c.h.b16 %v348
    %v395 = vunpack.c.l.b16 %v349
    %v396 = vunpack.c.h.b16 %v349
    %v397 = vunpack.c.l.b16 %v350
    %v398 = vunpack.c.h.b16 %v350
    %v399 = vpack.c.b16 %v369, %v367
    %v400 = vpack.c.b16 %v370, %v368
    %v401 = vpack.c.b16 %v373, %v371
    %v402 = vpack.c.b16 %v374, %v372
    %v403 = vpack.c.b16 %v377, %v375
    %v404 = vpack.c.b16 %v378, %v376
    %v405 = vpack.c.b16 %v381, %v379
    %v406 = vpack.c.b16 %v382, %v380
    %v407 = vpack.c.b16 %v385, %v383
    %v408 = vpack.c.b16 %v386, %v384
    %v409 = vpack.c.b16 %v389, %v387
    %v410 = vpack.c.b16 %v390, %v388
    %v411 = vpack.c.b16 %v393, %v391
    %v412 = vpack.c.b16 %v394, %v392
    %v413 = vpack.c.b16 %v397, %v395
    %v414 = vpack.c.b16 %v398, %v396
    %431 = vmatprep.subr.bf16.mxu0 %v414
    %432 = vmatpush1.bf16.msra.mxu0 %v413
    %433 = vmatprep.subr.bf16.mxu0 %v412
    %434 = vmatpush1.bf16.msra.mxu0 %v411
    %435 = vmatprep.subr.bf16.mxu0 %v410
    %436 = vmatpush1.bf16.msra.mxu0 %v409
    %437 = vmatprep.subr.bf16.mxu0 %v408
    %438 = vmatpush1.bf16.msra.mxu0 %v407
    %439 = vmatprep.subr.bf16.mxu0 %v406
    %440 = vmatpush1.bf16.msra.mxu0 %v405
    %441 = vmatprep.subr.bf16.mxu0 %v404
    %442 = vmatpush1.bf16.msra.mxu0 %v403
    %443 = vmatprep.subr.bf16.mxu0 %v402
    %444 = vmatpush1.bf16.msra.mxu0 %v401
    %445 = vmatprep.subr.bf16.mxu0 %v400
    %446 = vmatpush1.bf16.msra.mxu0 %v399
    %447 = vmatprep.subr.bf16.mxu0 0
    %448 = vmatpush2.bf16.msra.mxu0 0
    %449 = vmatprep.subr.bf16.mxu0 0
    %450 = vmatpush2.bf16.msra.mxu0 0
    %451 = vmatprep.subr.bf16.mxu0 0
    %452 = vmatpush2.bf16.msra.mxu0 0
    %453 = vmatprep.subr.bf16.mxu0 0
    %454 = vmatpush2.bf16.msra.mxu0 0
    %455 = vmatprep.subr.bf16.mxu0 0
    %456 = vmatpush2.bf16.msra.mxu0 0
    %457 = vmatprep.subr.bf16.mxu0 0
    %458 = vmatpush2.bf16.msra.mxu0 0
    %459 = vmatprep.subr.bf16.mxu0 0
    %460 = vmatpush2.bf16.msra.mxu0 0
    %461 = vmatprep.subr.bf16.mxu0 0
    %462 = vmatpush2.bf16.msra.mxu0 0
    %463 = vmatprep.mubr.bf16.mxu0 0
    %464 = vmatmul.mubr.bf16.gmra.mxu0 %v327
    %v465 = vpop.f32.mrf.mxu0
    %v466 = vadd.f32 0.0, %v465
    %v467 = vpop.f32.mrf.mxu0
    %v468 = vadd.f32 0.0, %v467
    %v469 = vpop.f32.mrf.mxu0
    %v470 = vadd.f32 0.0, %v469
    %v471 = vpop.f32.mrf.mxu0
    %v472 = vadd.f32 0.0, %v471
    %473 = vmatprep.mubr.bf16.mxu0 0
    %474 = vmatmul.mubr.bf16.gmra.mxu0 %v328
    %v475 = vpop.f32.mrf.mxu0
    %v476 = vadd.f32 0.0, %v475
    %v477 = vpop.f32.mrf.mxu0
    %v478 = vadd.f32 0.0, %v477
    %v479 = vpop.f32.mrf.mxu0
    %v480 = vadd.f32 0.0, %v479
    %v481 = vpop.f32.mrf.mxu0
    %v482 = vadd.f32 0.0, %v481
    %483 = vmatprep.mubr.bf16.mxu0 0
    %484 = vmatmul.mubr.bf16.gmra.mxu0 %v329
    %v485 = vpop.f32.mrf.mxu0
    %v486 = vadd.f32 0.0, %v485
    %v487 = vpop.f32.mrf.mxu0
    %v488 = vadd.f32 0.0, %v487
    %v489 = vpop.f32.mrf.mxu0
    %v490 = vadd.f32 0.0, %v489
    %v491 = vpop.f32.mrf.mxu0
    %v492 = vadd.f32 0.0, %v491
    %493 = vmatprep.mubr.bf16.mxu0 0
    %494 = vmatmul.mubr.bf16.gmra.mxu0 %v330
    %v495 = vpop.f32.mrf.mxu0
    %v496 = vadd.f32 0.0, %v495
    %v497 = vpop.f32.mrf.mxu0
    %v498 = vadd.f32 0.0, %v497
    %v499 = vpop.f32.mrf.mxu0
    %v500 = vadd.f32 0.0, %v499
    %v501 = vpop.f32.mrf.mxu0
    %v502 = vadd.f32 0.0, %v501
    %503 = vmatprep.mubr.bf16.mxu0 0
    %504 = vmatmul.mubr.bf16.gmra.mxu0 %v331
    %v505 = vpop.f32.mrf.mxu0
    %v506 = vadd.f32 0.0, %v505
    %v507 = vpop.f32.mrf.mxu0
    %v508 = vadd.f32 0.0, %v507
    %v509 = vpop.f32.mrf.mxu0
    %v510 = vadd.f32 0.0, %v509
    %v511 = vpop.f32.mrf.mxu0
    %v512 = vadd.f32 0.0, %v511
    %513 = vmatprep.mubr.bf16.mxu0 0
    %514 = vmatmul.mubr.bf16.gmra.mxu0 %v332
    %v515 = vpop.f32.mrf.mxu0
    %v516 = vadd.f32 0.0, %v515
    %v517 = vpop.f32.mrf.mxu0
    %v518 = vadd.f32 0.0, %v517
    %v519 = vpop.f32.mrf.mxu0
    %v520 = vadd.f32 0.0, %v519
    %v521 = vpop.f32.mrf.mxu0
    %v522 = vadd.f32 0.0, %v521
    %523 = vmatprep.mubr.bf16.mxu0 0
    %524 = vmatmul.mubr.bf16.gmra.mxu0 %v333
    %v525 = vpop.f32.mrf.mxu0
    %v526 = vadd.f32 0.0, %v525
    %v527 = vpop.f32.mrf.mxu0
    %v528 = vadd.f32 0.0, %v527
    %v529 = vpop.f32.mrf.mxu0
    %v530 = vadd.f32 0.0, %v529
    %v531 = vpop.f32.mrf.mxu0
    %v532 = vadd.f32 0.0, %v531
    %533 = vmatprep.mubr.bf16.mxu0 0
    %534 = vmatmul.mubr.bf16.gmra.mxu0 %v334
    %v535 = vpop.f32.mrf.mxu0
    %v536 = vadd.f32 0.0, %v535
    %v537 = vpop.f32.mrf.mxu0
    %v538 = vadd.f32 0.0, %v537
    %v539 = vpop.f32.mrf.mxu0
    %v540 = vadd.f32 0.0, %v539
    %v541 = vpop.f32.mrf.mxu0
    %v542 = vadd.f32 0.0, %v541
    %543 = vdwg.mxu0
    %v544 = vpack.c.bf16 %v472, %v468
    %v545 = vpack.c.bf16 %v482, %v478
    %v546 = vpack.c.bf16 %v492, %v488
    %v547 = vpack.c.bf16 %v502, %v498
    %v548 = vpack.c.bf16 %v512, %v508
    %v549 = vpack.c.bf16 %v522, %v518
    %v550 = vpack.c.bf16 %v532, %v528
    %v551 = vpack.c.bf16 %v542, %v538
    %v552 = vld [vmem:[#allocation2] sm:$0xf]
    %v553 = vld [vmem:[#allocation2 + $0x4] sm:$0xf]
    %v554 = vld [vmem:[#allocation2 + $0x8] sm:$0xf]
    %v555 = vld [vmem:[#allocation2 + $0xc] sm:$0xf]
    %v556 = vld [vmem:[#allocation2 + $0x10] sm:$0xf]
    %v557 = vld [vmem:[#allocation2 + $0x14] sm:$0xf]
    %v558 = vld [vmem:[#allocation2 + $0x18] sm:$0xf]
    %v559 = vld [vmem:[#allocation2 + $0x1c] sm:$0xf]
    %v560 = vld [vmem:[#allocation2 + $0x20] sm:$0xf]
    %v561 = vld [vmem:[#allocation2 + $0x24] sm:$0xf]
    %v562 = vld [vmem:[#allocation2 + $0x28] sm:$0xf]
    %v563 = vld [vmem:[#allocation2 + $0x2c] sm:$0xf]
    %v564 = vld [vmem:[#allocation2 + $0x30] sm:$0xf]
    %v565 = vld [vmem:[#allocation2 + $0x34] sm:$0xf]
    %v566 = vld [vmem:[#allocation2 + $0x38] sm:$0xf]
    %v567 = vld [vmem:[#allocation2 + $0x3c] sm:$0xf]
    %v584 = vunpack.c.l.b16 %v552
    %v585 = vunpack.c.l.b16 %v553
    %v586 = vunpack.c.l.b16 %v554
    %v587 = vunpack.c.l.b16 %v555
    %v588 = vunpack.c.l.b16 %v556
    %v589 = vunpack.c.l.b16 %v557
    %v590 = vunpack.c.l.b16 %v558
    %v591 = vunpack.c.l.b16 %v559
    %v592 = vunpack.c.l.b16 %v560
    %v593 = vunpack.c.l.b16 %v561
    %v594 = vunpack.c.l.b16 %v562
    %v595 = vunpack.c.l.b16 %v563
    %v596 = vunpack.c.l.b16 %v564
    %v597 = vunpack.c.l.b16 %v565
    %v598 = vunpack.c.l.b16 %v566
    %v599 = vunpack.c.l.b16 %v567
    %v600 = vpack.c.b16 %v585, %v584
    %v601 = vpack.c.b16 %v587, %v586
    %v602 = vpack.c.b16 %v589, %v588
    %v603 = vpack.c.b16 %v591, %v590
    %v604 = vpack.c.b16 %v593, %v592
    %v605 = vpack.c.b16 %v595, %v594
    %v606 = vpack.c.b16 %v597, %v596
    %v607 = vpack.c.b16 %v599, %v598
    %616 = vmatprep.subr.bf16.mxu0 0
    %617 = vmatpush1.bf16.msra.mxu0 %v551
    %618 = vmatprep.subr.bf16.mxu0 0
    %619 = vmatpush1.bf16.msra.mxu0 %v550
    %620 = vmatprep.subr.bf16.mxu0 0
    %621 = vmatpush1.bf16.msra.mxu0 %v549
    %622 = vmatprep.subr.bf16.mxu0 0
    %623 = vmatpush1.bf16.msra.mxu0 %v548
    %624 = vmatprep.subr.bf16.mxu0 0
    %625 = vmatpush1.bf16.msra.mxu0 %v547
    %626 = vmatprep.subr.bf16.mxu0 0
    %627 = vmatpush1.bf16.msra.mxu0 %v546
    %628 = vmatprep.subr.bf16.mxu0 0
    %629 = vmatpush1.bf16.msra.mxu0 %v545
    %630 = vmatprep.subr.bf16.mxu0 0
    %631 = vmatpush1.bf16.msra.mxu0 %v544
    %632 = vmatprep.subr.bf16.mxu0 0
    %633 = vmatpush2.bf16.msra.mxu0 0
    %634 = vmatprep.subr.bf16.mxu0 0
    %635 = vmatpush2.bf16.msra.mxu0 0
    %636 = vmatprep.subr.bf16.mxu0 0
    %637 = vmatpush2.bf16.msra.mxu0 0
    %638 = vmatprep.subr.bf16.mxu0 0
    %639 = vmatpush2.bf16.msra.mxu0 0
    %640 = vmatprep.subr.bf16.mxu0 0
    %641 = vmatpush2.bf16.msra.mxu0 0
    %642 = vmatprep.subr.bf16.mxu0 0
    %643 = vmatpush2.bf16.msra.mxu0 0
    %644 = vmatprep.subr.bf16.mxu0 0
    %645 = vmatpush2.bf16.msra.mxu0 0
    %646 = vmatprep.subr.bf16.mxu0 0
    %647 = vmatpush2.bf16.msra.mxu0 0
    %648 = vmatprep.mubr.bf16.mxu0 0
    %649 = vmatmul.mubr.bf16.gmra.mxu0 %v600
    %v650 = vpop.f32.mrf.mxu0
    %v651 = vadd.f32 0.0, %v650
    %v652 = vpop.f32.mrf.mxu0
    %v653 = vpop.f32.mrf.mxu0
    %v654 = vadd.f32 0.0, %v653
    %v655 = vpop.f32.mrf.mxu0
    %656 = vmatprep.mubr.bf16.mxu0 0
    %657 = vmatmul.mubr.bf16.gmra.mxu0 %v601
    %v658 = vpop.f32.mrf.mxu0
    %v659 = vadd.f32 0.0, %v658
    %v660 = vpop.f32.mrf.mxu0
    %v661 = vpop.f32.mrf.mxu0
    %v662 = vadd.f32 0.0, %v661
    %v663 = vpop.f32.mrf.mxu0
    %664 = vmatprep.mubr.bf16.mxu0 0
    %665 = vmatmul.mubr.bf16.gmra.mxu0 %v602
    %v666 = vpop.f32.mrf.mxu0
    %v667 = vadd.f32 0.0, %v666
    %v668 = vpop.f32.mrf.mxu0
    %v669 = vpop.f32.mrf.mxu0
    %v670 = vadd.f32 0.0, %v669
    %v671 = vpop.f32.mrf.mxu0
    %672 = vmatprep.mubr.bf16.mxu0 0
    %673 = vmatmul.mubr.bf16.gmra.mxu0 %v603
    %v674 = vpop.f32.mrf.mxu0
    %v675 = vadd.f32 0.0, %v674
    %v676 = vpop.f32.mrf.mxu0
    %v677 = vpop.f32.mrf.mxu0
    %v678 = vadd.f32 0.0, %v677
    %v679 = vpop.f32.mrf.mxu0
    %680 = vmatprep.mubr.bf16.mxu0 0
    %681 = vmatmul.mubr.bf16.gmra.mxu0 %v604
    %v682 = vpop.f32.mrf.mxu0
    %v683 = vadd.f32 0.0, %v682
    %v684 = vpop.f32.mrf.mxu0
    %v685 = vpop.f32.mrf.mxu0
    %v686 = vadd.f32 0.0, %v685
    %v687 = vpop.f32.mrf.mxu0
    %688 = vmatprep.mubr.bf16.mxu0 0
    %689 = vmatmul.mubr.bf16.gmra.mxu0 %v605
    %v690 = vpop.f32.mrf.mxu0
    %v691 = vadd.f32 0.0, %v690
    %v692 = vpop.f32.mrf.mxu0
    %v693 = vpop.f32.mrf.mxu0
    %v694 = vadd.f32 0.0, %v693
    %v695 = vpop.f32.mrf.mxu0
    %696 = vmatprep.mubr.bf16.mxu0 0
    %697 = vmatmul.mubr.bf16.gmra.mxu0 %v606
    %v698 = vpop.f32.mrf.mxu0
    %v699 = vadd.f32 0.0, %v698
    %v700 = vpop.f32.mrf.mxu0
    %v701 = vpop.f32.mrf.mxu0
    %v702 = vadd.f32 0.0, %v701
    %v703 = vpop.f32.mrf.mxu0
    %704 = vmatprep.mubr.bf16.mxu0 0
    %705 = vmatmul.mubr.bf16.gmra.mxu0 %v607
    %v706 = vpop.f32.mrf.mxu0
    %v707 = vadd.f32 0.0, %v706
    %v708 = vpop.f32.mrf.mxu0
    %v709 = vpop.f32.mrf.mxu0
    %v710 = vadd.f32 0.0, %v709
    %v711 = vpop.f32.mrf.mxu0
    %712 = vdwg.mxu0
    %v713 = vld [vmem:[%s3] sm:$0xff]
    %v714 = vld [vmem:[%s3 + $0x8] sm:$0xff]
    %v715 = vld [vmem:[%s3 + $0x10] sm:$0xff]
    %v716 = vld [vmem:[%s3 + $0x18] sm:$0xff]
    %v717 = vld [vmem:[%s3 + $0x20] sm:$0xff]
    %v718 = vld [vmem:[%s3 + $0x28] sm:$0xff]
    %v719 = vld [vmem:[%s3 + $0x30] sm:$0xff]
    %v720 = vld [vmem:[%s3 + $0x38] sm:$0xff]
    %v721 = vld [vmem:[%s3 + $0x40] sm:$0xff]
    %v722 = vld [vmem:[%s3 + $0x48] sm:$0xff]
    %v723 = vld [vmem:[%s3 + $0x50] sm:$0xff]
    %v724 = vld [vmem:[%s3 + $0x58] sm:$0xff]
    %v725 = vld [vmem:[%s3 + $0x60] sm:$0xff]
    %v726 = vld [vmem:[%s3 + $0x68] sm:$0xff]
    %v727 = vld [vmem:[%s3 + $0x70] sm:$0xff]
    %v728 = vld [vmem:[%s3 + $0x78] sm:$0xff]
    %730 = vset.pattern.permute.xlu0 0
    %731 = vperm.xlu0 %730, %v713
    %v732 = vpop.permute.xlu0 %731
    %735 = vset.pattern.permute.xlu0 0
    %736 = vperm.xlu0 %735, %v714
    %v737 = vpop.permute.xlu0 %736
    %740 = vset.pattern.permute.xlu0 0
    %741 = vperm.xlu0 %740, %v715
    %v742 = vpop.permute.xlu0 %741
    %745 = vset.pattern.permute.xlu0 0
    %746 = vperm.xlu0 %745, %v716
    %v747 = vpop.permute.xlu0 %746
    %750 = vset.pattern.permute.xlu0 0
    %751 = vperm.xlu0 %750, %v717
    %v752 = vpop.permute.xlu0 %751
    %755 = vset.pattern.permute.xlu0 0
    %756 = vperm.xlu0 %755, %v718
    %v757 = vpop.permute.xlu0 %756
    %760 = vset.pattern.permute.xlu0 0
    %761 = vperm.xlu0 %760, %v719
    %v762 = vpop.permute.xlu0 %761
    %765 = vset.pattern.permute.xlu0 0
    %766 = vperm.xlu0 %765, %v720
    %v767 = vpop.permute.xlu0 %766
    %770 = vset.pattern.permute.xlu0 0
    %771 = vperm.xlu0 %770, %v721
    %v772 = vpop.permute.xlu0 %771
    %775 = vset.pattern.permute.xlu0 0
    %776 = vperm.xlu0 %775, %v722
    %v777 = vpop.permute.xlu0 %776
    %780 = vset.pattern.permute.xlu0 0
    %781 = vperm.xlu0 %780, %v723
    %v782 = vpop.permute.xlu0 %781
    %785 = vset.pattern.permute.xlu0 0
    %786 = vperm.xlu0 %785, %v724
    %v787 = vpop.permute.xlu0 %786
    %790 = vset.pattern.permute.xlu0 0
    %791 = vperm.xlu0 %790, %v725
    %v792 = vpop.permute.xlu0 %791
    %795 = vset.pattern.permute.xlu0 0
    %796 = vperm.xlu0 %795, %v726
    %v797 = vpop.permute.xlu0 %796
    %800 = vset.pattern.permute.xlu0 0
    %801 = vperm.xlu0 %800, %v727
    %v802 = vpop.permute.xlu0 %801
    %805 = vset.pattern.permute.xlu0 0
    %806 = vperm.xlu0 %805, %v728
    %v807 = vpop.permute.xlu0 %806
    %v809 = vmul.f32 %v651, %v732
    %v810 = vmul.f32 %v654, %v737
    %v811 = vmul.f32 %v659, %v742
    %v812 = vmul.f32 %v662, %v747
    %v813 = vmul.f32 %v667, %v752
    %v814 = vmul.f32 %v670, %v757
    %v815 = vmul.f32 %v675, %v762
    %v816 = vmul.f32 %v678, %v767
    %v817 = vmul.f32 %v683, %v772
    %v818 = vmul.f32 %v686, %v777
    %v819 = vmul.f32 %v691, %v782
    %v820 = vmul.f32 %v694, %v787
    %v821 = vmul.f32 %v699, %v792
    %v822 = vmul.f32 %v702, %v797
    %v823 = vmul.f32 %v707, %v802
    %v824 = vmul.f32 %v710, %v807
    %v825 = vadd.f32 %v466, %v809
    %v826 = vadd.f32 %v470, %v810
    %v827 = vadd.f32 %v476, %v811
    %v828 = vadd.f32 %v480, %v812
    %v829 = vadd.f32 %v486, %v813
    %v830 = vadd.f32 %v490, %v814
    %v831 = vadd.f32 %v496, %v815
    %v832 = vadd.f32 %v500, %v816
    %v833 = vadd.f32 %v506, %v817
    %v834 = vadd.f32 %v510, %v818
    %v835 = vadd.f32 %v516, %v819
    %v836 = vadd.f32 %v520, %v820
    %v837 = vadd.f32 %v526, %v821
    %v838 = vadd.f32 %v530, %v822
    %v839 = vadd.f32 %v536, %v823
    %v840 = vadd.f32 %v540, %v824
    %v841 = vld [vmem:[%s8] sm:$0x1]
    %v843 = vlaneseq
    %v844 = vshrl.u32 %v843, 7
    %v845 = vsub.s32 0, %v844
    %v846 = vrot.slane %v841, %v845
    %v848 = vadd.f32 %v825, %v846
    %v849 = vadd.f32 %v826, %v846
    %v850 = vadd.f32 %v827, %v846
    %v851 = vadd.f32 %v828, %v846
    %v852 = vadd.f32 %v829, %v846
    %v853 = vadd.f32 %v830, %v846
    %v854 = vadd.f32 %v831, %v846
    %v855 = vadd.f32 %v832, %v846
    %v856 = vadd.f32 %v833, %v846
    %v857 = vadd.f32 %v834, %v846
    %v858 = vadd.f32 %v835, %v846
    %v859 = vadd.f32 %v836, %v846
    %v860 = vadd.f32 %v837, %v846
    %v861 = vadd.f32 %v838, %v846
    %v862 = vadd.f32 %v839, %v846
    %v863 = vadd.f32 %v840, %v846
    %v864 = vmax.f32 %v848, 0.0
    %v865 = vmax.f32 %v849, 0.0
    %v866 = vmax.f32 %v850, 0.0
    %v867 = vmax.f32 %v851, 0.0
    %v868 = vmax.f32 %v852, 0.0
    %v869 = vmax.f32 %v853, 0.0
    %v870 = vmax.f32 %v854, 0.0
    %v871 = vmax.f32 %v855, 0.0
    %v872 = vmax.f32 %v856, 0.0
    %v873 = vmax.f32 %v857, 0.0
    %v874 = vmax.f32 %v858, 0.0
    %v875 = vmax.f32 %v859, 0.0
    %v876 = vmax.f32 %v860, 0.0
    %v877 = vmax.f32 %v861, 0.0
    %v878 = vmax.f32 %v862, 0.0
    %v879 = vmax.f32 %v863, 0.0
    %v880 = vld [vmem:[%s9] sm:$0x1]
    %v881 = vld [vmem:[%s10] sm:$0x1]
    %vm882 = vcmp.lt.s32.totalorder %v87, 32
    %v883 = vsel %vm882, 1, 0
    %v884 = vcvt.s32.f32 %v883
    %885 = vadd.xlane.f32.xlu0 %v864
    %v886 = vpop.xlane.xlu0 %885
    %887 = vadd.xlane.f32.xlu0 %v865
    %v888 = vpop.xlane.xlu0 %887
    %889 = vadd.xlane.f32.xlu0 %v866
    %v890 = vpop.xlane.xlu0 %889
    %891 = vadd.xlane.f32.xlu0 %v867
    %v892 = vpop.xlane.xlu0 %891
    %893 = vadd.xlane.f32.xlu0 %v868
    %v894 = vpop.xlane.xlu0 %893
    %895 = vadd.xlane.f32.xlu0 %v869
    %v896 = vpop.xlane.xlu0 %895
    %897 = vadd.xlane.f32.xlu0 %v870
    %v898 = vpop.xlane.xlu0 %897
    %899 = vadd.xlane.f32.xlu0 %v871
    %v900 = vpop.xlane.xlu0 %899
    %901 = vadd.xlane.f32.xlu0 %v872
    %v902 = vpop.xlane.xlu0 %901
    %903 = vadd.xlane.f32.xlu0 %v873
    %v904 = vpop.xlane.xlu0 %903
    %905 = vadd.xlane.f32.xlu0 %v874
    %v906 = vpop.xlane.xlu0 %905
    %907 = vadd.xlane.f32.xlu0 %v875
    %v908 = vpop.xlane.xlu0 %907
    %909 = vadd.xlane.f32.xlu0 %v876
    %v910 = vpop.xlane.xlu0 %909
    %911 = vadd.xlane.f32.xlu0 %v877
    %v912 = vpop.xlane.xlu0 %911
    %913 = vadd.xlane.f32.xlu0 %v878
    %v914 = vpop.xlane.xlu0 %913
    %915 = vadd.xlane.f32.xlu0 %v879
    %v916 = vpop.xlane.xlu0 %915
    %v917 = vmul.f32 %v886, 0.03125
    %v918 = vmul.f32 %v888, 0.03125
    %v919 = vmul.f32 %v890, 0.03125
    %v920 = vmul.f32 %v892, 0.03125
    %v921 = vmul.f32 %v894, 0.03125
    %v922 = vmul.f32 %v896, 0.03125
    %v923 = vmul.f32 %v898, 0.03125
    %v924 = vmul.f32 %v900, 0.03125
    %v925 = vmul.f32 %v902, 0.03125
    %v926 = vmul.f32 %v904, 0.03125
    %v927 = vmul.f32 %v906, 0.03125
    %v928 = vmul.f32 %v908, 0.03125
    %v929 = vmul.f32 %v910, 0.03125
    %v930 = vmul.f32 %v912, 0.03125
    %v931 = vmul.f32 %v914, 0.03125
    %v932 = vmul.f32 %v916, 0.03125
    %v933 = vsub.f32 %v864, %v917
    %v934 = vsub.f32 %v865, %v918
    %v935 = vsub.f32 %v866, %v919
    %v936 = vsub.f32 %v867, %v920
    %v937 = vsub.f32 %v868, %v921
    %v938 = vsub.f32 %v869, %v922
    %v939 = vsub.f32 %v870, %v923
    %v940 = vsub.f32 %v871, %v924
    %v941 = vsub.f32 %v872, %v925
    %v942 = vsub.f32 %v873, %v926
    %v943 = vsub.f32 %v874, %v927
    %v944 = vsub.f32 %v875, %v928
    %v945 = vsub.f32 %v876, %v929
    %v946 = vsub.f32 %v877, %v930
    %v947 = vsub.f32 %v878, %v931
    %v948 = vsub.f32 %v879, %v932
    %v949 = vmul.f32 %v933, %v884
    %v950 = vmul.f32 %v934, %v884
    %v951 = vmul.f32 %v935, %v884
    %v952 = vmul.f32 %v936, %v884
    %v953 = vmul.f32 %v937, %v884
    %v954 = vmul.f32 %v938, %v884
    %v955 = vmul.f32 %v939, %v884
    %v956 = vmul.f32 %v940, %v884
    %v957 = vmul.f32 %v941, %v884
    %v958 = vmul.f32 %v942, %v884
    %v959 = vmul.f32 %v943, %v884
    %v960 = vmul.f32 %v944, %v884
    %v961 = vmul.f32 %v945, %v884
    %v962 = vmul.f32 %v946, %v884
    %v963 = vmul.f32 %v947, %v884
    %v964 = vmul.f32 %v948, %v884
    %v965 = vmul.f32 %v949, %v949
    %v966 = vmul.f32 %v950, %v950
    %v967 = vmul.f32 %v951, %v951
    %v968 = vmul.f32 %v952, %v952
    %v969 = vmul.f32 %v953, %v953
    %v970 = vmul.f32 %v954, %v954
    %v971 = vmul.f32 %v955, %v955
    %v972 = vmul.f32 %v956, %v956
    %v973 = vmul.f32 %v957, %v957
    %v974 = vmul.f32 %v958, %v958
    %v975 = vmul.f32 %v959, %v959
    %v976 = vmul.f32 %v960, %v960
    %v977 = vmul.f32 %v961, %v961
    %v978 = vmul.f32 %v962, %v962
    %v979 = vmul.f32 %v963, %v963
    %v980 = vmul.f32 %v964, %v964
    %981 = vadd.xlane.f32.xlu0 %v965
    %v982 = vpop.xlane.xlu0 %981
    %983 = vadd.xlane.f32.xlu0 %v966
    %v984 = vpop.xlane.xlu0 %983
    %985 = vadd.xlane.f32.xlu0 %v967
    %v986 = vpop.xlane.xlu0 %985
    %987 = vadd.xlane.f32.xlu0 %v968
    %v988 = vpop.xlane.xlu0 %987
    %989 = vadd.xlane.f32.xlu0 %v969
    %v990 = vpop.xlane.xlu0 %989
    %991 = vadd.xlane.f32.xlu0 %v970
    %v992 = vpop.xlane.xlu0 %991
    %993 = vadd.xlane.f32.xlu0 %v971
    %v994 = vpop.xlane.xlu0 %993
    %995 = vadd.xlane.f32.xlu0 %v972
    %v996 = vpop.xlane.xlu0 %995
    %997 = vadd.xlane.f32.xlu0 %v973
    %v998 = vpop.xlane.xlu0 %997
    %999 = vadd.xlane.f32.xlu0 %v974
    %v1000 = vpop.xlane.xlu0 %999
    %1001 = vadd.xlane.f32.xlu0 %v975
    %v1002 = vpop.xlane.xlu0 %1001
    %1003 = vadd.xlane.f32.xlu0 %v976
    %v1004 = vpop.xlane.xlu0 %1003
    %1005 = vadd.xlane.f32.xlu0 %v977
    %v1006 = vpop.xlane.xlu0 %1005
    %1007 = vadd.xlane.f32.xlu0 %v978
    %v1008 = vpop.xlane.xlu0 %1007
    %1009 = vadd.xlane.f32.xlu0 %v979
    %v1010 = vpop.xlane.xlu0 %1009
    %1011 = vadd.xlane.f32.xlu0 %v980
    %v1012 = vpop.xlane.xlu0 %1011
    %v1013 = vmul.f32 %v982, 0.03125
    %v1014 = vmul.f32 %v984, 0.03125
    %v1015 = vmul.f32 %v986, 0.03125
    %v1016 = vmul.f32 %v988, 0.03125
    %v1017 = vmul.f32 %v990, 0.03125
    %v1018 = vmul.f32 %v992, 0.03125
    %v1019 = vmul.f32 %v994, 0.03125
    %v1020 = vmul.f32 %v996, 0.03125
    %v1021 = vmul.f32 %v998, 0.03125
    %v1022 = vmul.f32 %v1000, 0.03125
    %v1023 = vmul.f32 %v1002, 0.03125
    %v1024 = vmul.f32 %v1004, 0.03125
    %v1025 = vmul.f32 %v1006, 0.03125
    %v1026 = vmul.f32 %v1008, 0.03125
    %v1027 = vmul.f32 %v1010, 0.03125
    %v1028 = vmul.f32 %v1012, 0.03125
    %v1029 = vadd.f32 %v1013, 1e-05
    %v1030 = vadd.f32 %v1014, 1e-05
    %v1031 = vadd.f32 %v1015, 1e-05
    %v1032 = vadd.f32 %v1016, 1e-05
    %v1033 = vadd.f32 %v1017, 1e-05
    %v1034 = vadd.f32 %v1018, 1e-05
    %v1035 = vadd.f32 %v1019, 1e-05
    %v1036 = vadd.f32 %v1020, 1e-05
    %v1037 = vadd.f32 %v1021, 1e-05
    %v1038 = vadd.f32 %v1022, 1e-05
    %v1039 = vadd.f32 %v1023, 1e-05
    %v1040 = vadd.f32 %v1024, 1e-05
    %v1041 = vadd.f32 %v1025, 1e-05
    %v1042 = vadd.f32 %v1026, 1e-05
    %v1043 = vadd.f32 %v1027, 1e-05
    %v1044 = vadd.f32 %v1028, 1e-05
    %v1045 = vrsqrt.pop %v1029
    %v1046 = vrsqrt.pop %v1030
    %v1047 = vrsqrt.pop %v1031
    %v1048 = vrsqrt.pop %v1032
    %v1049 = vrsqrt.pop %v1033
    %v1050 = vrsqrt.pop %v1034
    %v1051 = vrsqrt.pop %v1035
    %v1052 = vrsqrt.pop %v1036
    %v1053 = vrsqrt.pop %v1037
    %v1054 = vrsqrt.pop %v1038
    %v1055 = vrsqrt.pop %v1039
    %v1056 = vrsqrt.pop %v1040
    %v1057 = vrsqrt.pop %v1041
    %v1058 = vrsqrt.pop %v1042
    %v1059 = vrsqrt.pop %v1043
    %v1060 = vrsqrt.pop %v1044
    %v1061 = vmul.f32 %v949, %v1045
    %v1062 = vmul.f32 %v950, %v1046
    %v1063 = vmul.f32 %v951, %v1047
    %v1064 = vmul.f32 %v952, %v1048
    %v1065 = vmul.f32 %v953, %v1049
    %v1066 = vmul.f32 %v954, %v1050
    %v1067 = vmul.f32 %v955, %v1051
    %v1068 = vmul.f32 %v956, %v1052
    %v1069 = vmul.f32 %v957, %v1053
    %v1070 = vmul.f32 %v958, %v1054
    %v1071 = vmul.f32 %v959, %v1055
    %v1072 = vmul.f32 %v960, %v1056
    %v1073 = vmul.f32 %v961, %v1057
    %v1074 = vmul.f32 %v962, %v1058
    %v1075 = vmul.f32 %v963, %v1059
    %v1076 = vmul.f32 %v964, %v1060
    %v1078 = vlaneseq
    %v1079 = vshrl.u32 %v1078, 7
    %v1080 = vsub.s32 0, %v1079
    %v1081 = vrot.slane %v880, %v1080
    %v1083 = vmul.f32 %v1061, %v1081
    %v1084 = vmul.f32 %v1062, %v1081
    %v1085 = vmul.f32 %v1063, %v1081
    %v1086 = vmul.f32 %v1064, %v1081
    %v1087 = vmul.f32 %v1065, %v1081
    %v1088 = vmul.f32 %v1066, %v1081
    %v1089 = vmul.f32 %v1067, %v1081
    %v1090 = vmul.f32 %v1068, %v1081
    %v1091 = vmul.f32 %v1069, %v1081
    %v1092 = vmul.f32 %v1070, %v1081
    %v1093 = vmul.f32 %v1071, %v1081
    %v1094 = vmul.f32 %v1072, %v1081
    %v1095 = vmul.f32 %v1073, %v1081
    %v1096 = vmul.f32 %v1074, %v1081
    %v1097 = vmul.f32 %v1075, %v1081
    %v1098 = vmul.f32 %v1076, %v1081
    %v1100 = vlaneseq
    %v1101 = vshrl.u32 %v1100, 7
    %v1102 = vsub.s32 0, %v1101
    %v1103 = vrot.slane %v881, %v1102
    %v1105 = vadd.f32 %v1083, %v1103
    %v1106 = vadd.f32 %v1084, %v1103
    %v1107 = vadd.f32 %v1085, %v1103
    %v1108 = vadd.f32 %v1086, %v1103
    %v1109 = vadd.f32 %v1087, %v1103
    %v1110 = vadd.f32 %v1088, %v1103
    %v1111 = vadd.f32 %v1089, %v1103
    %v1112 = vadd.f32 %v1090, %v1103
    %v1113 = vadd.f32 %v1091, %v1103
    %v1114 = vadd.f32 %v1092, %v1103
    %v1115 = vadd.f32 %v1093, %v1103
    %v1116 = vadd.f32 %v1094, %v1103
    %v1117 = vadd.f32 %v1095, %v1103
    %v1118 = vadd.f32 %v1096, %v1103
    %v1119 = vadd.f32 %v1097, %v1103
    %v1120 = vadd.f32 %v1098, %v1103
    %v1121 = vld [vmem:[%s2] sm:$0xf]
    %v1122 = vld [vmem:[%s2 + $0x4] sm:$0xf]
    %v1123 = vpack.c.bf16 %v1106, %v1105
    %v1124 = vpack.c.bf16 %v1108, %v1107
    %v1125 = vpack.c.bf16 %v1110, %v1109
    %v1126 = vpack.c.bf16 %v1112, %v1111
    %v1127 = vpack.c.bf16 %v1114, %v1113
    %v1128 = vpack.c.bf16 %v1116, %v1115
    %v1129 = vpack.c.bf16 %v1118, %v1117
    %v1130 = vpack.c.bf16 %v1120, %v1119
    %v1133 = vunpack.c.l.b16 %v1121
    %v1134 = vunpack.c.l.b16 %v1122
    %v1135 = vpack.c.b16 %v1134, %v1133
    %1137 = vmatprep.subr.bf16.mxu0 0
    %1138 = vmatpush1.bf16.msra.mxu0 %v1130
    %1139 = vmatprep.subr.bf16.mxu0 0
    %1140 = vmatpush1.bf16.msra.mxu0 %v1129
    %1141 = vmatprep.subr.bf16.mxu0 0
    %1142 = vmatpush1.bf16.msra.mxu0 %v1128
    %1143 = vmatprep.subr.bf16.mxu0 0
    %1144 = vmatpush1.bf16.msra.mxu0 %v1127
    %1145 = vmatprep.subr.bf16.mxu0 0
    %1146 = vmatpush1.bf16.msra.mxu0 %v1126
    %1147 = vmatprep.subr.bf16.mxu0 0
    %1148 = vmatpush1.bf16.msra.mxu0 %v1125
    %1149 = vmatprep.subr.bf16.mxu0 0
    %1150 = vmatpush1.bf16.msra.mxu0 %v1124
    %1151 = vmatprep.subr.bf16.mxu0 0
    %1152 = vmatpush1.bf16.msra.mxu0 %v1123
    %1153 = vmatprep.subr.bf16.mxu0 0
    %1154 = vmatpush2.bf16.msra.mxu0 0
    %1155 = vmatprep.subr.bf16.mxu0 0
    %1156 = vmatpush2.bf16.msra.mxu0 0
    %1157 = vmatprep.subr.bf16.mxu0 0
    %1158 = vmatpush2.bf16.msra.mxu0 0
    %1159 = vmatprep.subr.bf16.mxu0 0
    %1160 = vmatpush2.bf16.msra.mxu0 0
    %1161 = vmatprep.subr.bf16.mxu0 0
    %1162 = vmatpush2.bf16.msra.mxu0 0
    %1163 = vmatprep.subr.bf16.mxu0 0
    %1164 = vmatpush2.bf16.msra.mxu0 0
    %1165 = vmatprep.subr.bf16.mxu0 0
    %1166 = vmatpush2.bf16.msra.mxu0 0
    %1167 = vmatprep.subr.bf16.mxu0 0
    %1168 = vmatpush2.bf16.msra.mxu0 0
    %1169 = vmatprep.mubr.bf16.mxu0 0
    %1170 = vmatmul.mubr.bf16.gmra.mxu0 %v1135
    %v1171 = vpop.f32.mrf.mxu0
    %v1172 = vadd.f32 0.0, %v1171
    %v1173 = vpop.f32.mrf.mxu0
    %v1174 = vpop.f32.mrf.mxu0
    %v1175 = vadd.f32 0.0, %v1174
    %v1176 = vpop.f32.mrf.mxu0
    %1177 = vdwg.mxu0
    %v1178 = vld [vmem:[%s4] sm:$0xff]
    %v1179 = vld [vmem:[%s4 + $0x8] sm:$0xff]
    %1181 = vset.pattern.permute.xlu0 0
    %1182 = vperm.xlu0 %1181, %v1178
    %v1183 = vpop.permute.xlu0 %1182
    %1186 = vset.pattern.permute.xlu0 0
    %1187 = vperm.xlu0 %1186, %v1179
    %v1188 = vpop.permute.xlu0 %1187
    %v1190 = vmul.f32 %v1172, %v1183
    %v1191 = vmul.f32 %v1175, %v1188
    %1192 = vst [vmem:[#allocation7] sm:$0xff] %v1190
    %1193 = vst [vmem:[#allocation7 + $0x8] sm:$0xff] %v1191
    // Predicated region
    $region54: #{tpu_custom_call.1} parent=1 // pred_check
      _
    $region55: #{tpu_custom_call.1} parent=1 // pred_check_branch
      %1195 = sbr.rel (0) target = $region57
    $region56: #{tpu_custom_call.1} parent=1 // pred_region
      %s1197 = ssub.s32 256, 256
      %1198 = vsyncadd [#allocation4], %s1197
      %s1199 = sshll.u32 [#allocation7], 4
      %s1200 = int_to_ptr.vmem [resolvable:$true] %s1199
      %1205 = dma.vmem_to_hbm [thread:$0]  %s1200, 256, %s11, [#allocation4], 128, 128, 8
    $region57: #{tpu_custom_call.1} parent=1 // pred_fallthru
      _
    // Predicated region
    $region58: #{tpu_custom_call.1} parent=1 // pred_check
      _
    $region59: #{tpu_custom_call.1} parent=1 // pred_check_branch
      %1207 = sbr.rel (0) target = $region61
    $region60: #{tpu_custom_call.1} parent=1 // pred_region
      %1208 = dma.done [#allocation4], 256
    $region61: #{tpu_custom_call.1} parent=1 // pred_fallthru
      _
    %1209 = vsyncpa [#allocation3], 1
    %1210 = vsyncpa [#allocation6], 1
    %1211 = vsyncpa [#allocation4], 1

</llo_original>
